<compile_context>
chip_gen: v6e
topology: v6e:2x2x1
jax: 0.10.0
libtpu: 0.0.40
codegen_flags: <defaults>
</compile_context>

<pallas_src>
import functools

import jax
import jax.numpy as jnp
from jax import lax
from jax.experimental import pallas as pl
from jax.experimental.pallas import tpu as pltpu

EPS = 1e-5          # torch.nn.LayerNorm default
NEG_INF = -1e30     # finite mask value (avoids -inf - -inf NaN hazards)


def _layernorm(x, g, b):
    mu = jnp.mean(x, axis=-1, keepdims=True)
    var = jnp.mean(jnp.square(x - mu), axis=-1, keepdims=True)
    return (x - mu) * lax.rsqrt(var + EPS) * g + b


# ----------------------------------------------------------------------------
# Kernel 1: ALL transformer blocks, fused.
#   grid = (batch_blocks, n_layer); batch axis "parallel", layer axis "arbitrary".
#   o_ref's block index depends only on the batch axis, so x lives in VMEM across
#   the layer loop and is written to HBM once per batch block.
# ----------------------------------------------------------------------------
def blocks_kernel(n_heads, head_size,
                  x_ref, g1_ref, be1_ref, wqkv_ref, wo_ref, bo_ref,
                  g2_ref, be2_ref, w1_ref, b1_ref, w2_ref, b2_ref,
                  o_ref):
    l = pl.program_id(1)

    @pl.when(l == 0)
    def _():
        o_ref[...] = x_ref[...]           # initialize resident activation

    _, T, C = o_ref.shape                 # batch block size is 1
    x = o_ref[...].reshape(T, C)          # (T, C) f32 residual stream
    scale = float(head_size) ** -0.5

    # ---- multi-head self-attention ----
    h = _layernorm(x, g1_ref[0], be1_ref[0])                    # (T, C) f32
    qkv = jnp.dot(h.astype(jnp.bfloat16), wqkv_ref[0],
                  preferred_element_type=jnp.float32)           # (T, 3C) f32
    q = qkv[:, :C]
    k = qkv[:, C:2 * C]
    v = qkv[:, 2 * C:]

    row = lax.broadcasted_iota(jnp.int32, (T, T), 0)
    col = lax.broadcasted_iota(jnp.int32, (T, T), 1)
    causal = row >= col

    ctx_parts = []
    for i in range(n_heads):              # static unrolled loop over heads
        s = i * head_size
        qh = q[:, s:s + head_size].astype(jnp.bfloat16)
        kh = k[:, s:s + head_size].astype(jnp.bfloat16)
        vh = v[:, s:s + head_size].astype(jnp.bfloat16)
        att = jnp.einsum('qd,kd->qk', qh, kh,
                         preferred_element_type=jnp.float32) * scale
        att = jnp.where(causal, att, NEG_INF)
        att = att - jnp.max(att, axis=-1, keepdims=True)
        p = jnp.exp(att)
        p = p * pl.reciprocal(jnp.sum(p, axis=-1, keepdims=True), approx=True)
        ctx_parts.append(jnp.dot(p.astype(jnp.bfloat16), vh,
                                 preferred_element_type=jnp.float32))
    ctx = jnp.concatenate(ctx_parts, axis=-1)                   # (T, C)

    proj = jnp.dot(ctx.astype(jnp.bfloat16), wo_ref[0],
                   preferred_element_type=jnp.float32) + bo_ref[0]
    x1 = x + proj                                               # residual 1

    # ---- feed-forward ----
    h2 = _layernorm(x1, g2_ref[0], be2_ref[0])
    hid = jnp.dot(h2.astype(jnp.bfloat16), w1_ref[0],
                  preferred_element_type=jnp.float32) + b1_ref[0]
    hid = jnp.maximum(hid, 0.0)
    ff = jnp.dot(hid.astype(jnp.bfloat16), w2_ref[0],
                 preferred_element_type=jnp.float32) + b2_ref[0]

    o_ref[...] = (x1 + ff).reshape(1, T, C)                     # residual 2


# ----------------------------------------------------------------------------
# Kernel 2: final LayerNorm + lm_head + per-token cross-entropy, fused.
#   grid = (batch_blocks,), "parallel".  Logits stay in VMEM for the CE part.
# ----------------------------------------------------------------------------
def head_loss_kernel(x_ref, gf_ref, bf_ref, wh_ref, bh_ref, tgt_ref,
                     logits_ref, nll_ref):
    _, T, C = x_ref.shape
    Vp = wh_ref.shape[-1]

    x = x_ref[...].reshape(T, C)
    h = _layernorm(x, gf_ref[...], bf_ref[...])                 # (T, C)
    logits = jnp.dot(h.astype(jnp.bfloat16), wh_ref[...],
                     preferred_element_type=jnp.float32) + bh_ref[...]   # (T, Vp)
    logits_ref[...] = logits.reshape(1, T, Vp)

    m = jnp.max(logits, axis=-1, keepdims=True)
    lse = m + jnp.log(jnp.sum(jnp.exp(logits - m), axis=-1, keepdims=True))  # (T,1)
    tgt = tgt_ref[...].reshape(T, 1)                             # (T, 1) int32
    col = lax.broadcasted_iota(jnp.int32, (T, Vp), 1)
    picked = jnp.sum(jnp.where(col == tgt, logits, 0.0),
                     axis=-1, keepdims=True)                     # (T, 1)
    nll_ref[...] = (lse - picked).reshape(1, T, 1)


# ----------------------------------------------------------------------------
# Wrappers
# ----------------------------------------------------------------------------
def run_blocks(x, W, n_heads, head_size):
    B, T, C = x.shape
    L = W['g1'].shape[0]

    def lspec(arr):  # one layer-slice per grid step along the layer axis
        nz = arr.ndim - 1
        return pl.BlockSpec((1,) + arr.shape[1:],
                            lambda bb, l, n=nz: (l,) + (0,) * n)

    x_spec = pl.BlockSpec((1, T, C), lambda bb, l: (bb, 0, 0))
    o_spec = pl.BlockSpec((1, T, C), lambda bb, l: (bb, 0, 0))

    return pl.pallas_call(
        functools.partial(blocks_kernel, n_heads, head_size),
        out_shape=jax.ShapeDtypeStruct((B, T, C), jnp.float32),
        grid=(B, L),
        in_specs=[x_spec,
                  lspec(W['g1']), lspec(W['be1']),
                  lspec(W['wqkv']), lspec(W['wo']), lspec(W['bo']),
                  lspec(W['g2']), lspec(W['be2']),
                  lspec(W['w1']), lspec(W['b1']),
                  lspec(W['w2']), lspec(W['b2'])],
        out_specs=o_spec,
        compiler_params=pltpu.CompilerParams(
            dimension_semantics=("parallel", "arbitrary")),
    )(x, W['g1'], W['be1'], W['wqkv'], W['wo'], W['bo'],
      W['g2'], W['be2'], W['w1'], W['b1'], W['w2'], W['b2'])


def run_head_loss(x, H, targets3, vocab):
    B, T, C = x.shape
    Vp = H['wh'].shape[-1]
    logits_p, nll = pl.pallas_call(
        head_loss_kernel,
        out_shape=(jax.ShapeDtypeStruct((B, T, Vp), jnp.float32),
                   jax.ShapeDtypeStruct((B, T, 1), jnp.float32)),
        grid=(B,),
        in_specs=[pl.BlockSpec((1, T, C), lambda b: (b, 0, 0)),
                  pl.BlockSpec((1, C), lambda b: (0, 0)),
                  pl.BlockSpec((1, C), lambda b: (0, 0)),
                  pl.BlockSpec((C, Vp), lambda b: (0, 0)),
                  pl.BlockSpec((1, Vp), lambda b: (0, 0)),
                  pl.BlockSpec((1, T, 1), lambda b: (b, 0, 0))],
        out_specs=(pl.BlockSpec((1, T, Vp), lambda b: (b, 0, 0)),
                   pl.BlockSpec((1, T, 1), lambda b: (b, 0, 0))),
        compiler_params=pltpu.CompilerParams(
            dimension_semantics=("parallel",)),
    )(x, H['gf'], H['bf'], H['wh'], H['bh'], targets3)
    logits = logits_p[:, :, :vocab]    # drop lane padding
    loss = jnp.mean(nll)               # mean over B*T tokens
    return logits, loss


def prepare_params(P):
    """Stack per-layer weights into (L, ...) arrays, fuse QKV, cast matrices to bf16,
    and pad the vocab dim of the lm_head to a multiple of 128 lanes."""
    blocks = P['blocks']
    stack = lambda name: jnp.stack([b[name] for b in blocks], axis=0)
    W = {
        'g1': stack('g1'), 'be1': stack('be1'),
        'wqkv': jnp.stack([jnp.concatenate([b['wq_t'], b['wk_t'], b['wv_t']], axis=1)
                           for b in blocks], axis=0).astype(jnp.bfloat16),
        'wo': stack('wo_t').astype(jnp.bfloat16),
        'bo': stack('bo'),
        'g2': stack('g2'), 'be2': stack('be2'),
        'w1': stack('w1_t').astype(jnp.bfloat16), 'b1': stack('b1'),
        'w2': stack('w2_t').astype(jnp.bfloat16), 'b2': stack('b2'),
    }
    C, V = P['wh_t'].shape
    Vp = pl.cdiv(V, 128) * 128
    wh = jnp.zeros((C, Vp), jnp.float32).at[:, :V].set(P['wh_t']).astype(jnp.bfloat16)
    bh = jnp.full((1, Vp), NEG_INF, jnp.float32).at[:, :V].set(P['bh'])
    H = {'gf': P['gf'], 'bf': P['bf'], 'wh': wh, 'bh': bh}
    return W, H


def nano_gpt_forward(tokens, targets, P, n_heads, head_size, vocab):
    W, H = prepare_params(P)
    B, T = tokens.shape
    # embedding gathers are glue (plain JAX)
    x = P['tok_embed'][tokens] + P['pos_embed'][jnp.arange(T)]
    x = run_blocks(x, W, n_heads, head_size)
    logits, loss = run_head_loss(x, H, targets[..., None].astype(jnp.int32), vocab)
    return logits, loss


# ----------------------------------------------------------------------------
# Pure-jnp f32 reference (same math as the PyTorch module) for a sanity check
# ----------------------------------------------------------------------------
def ref_forward(tokens, targets, P, n_heads, head_size, vocab):
    hp = lax.Precision.HIGHEST
    B, T = tokens.shape
    x = P['tok_embed'][tokens] + P['pos_embed'][jnp.arange(T)]
    scale = float(head_size) ** -0.5
    causal = jnp.tril(jnp.ones((T, T), bool))
    for layer in P['blocks']:
        h = _layernorm(x, layer['g1'], layer['be1'])
        q = jnp.einsum('btc,ch->bth', h, layer['wq_t'], precision=hp).reshape(B, T, n_heads, head_size)
        k = jnp.einsum('btc,ch->bth', h, layer['wk_t'], precision=hp).reshape(B, T, n_heads, head_size)
        v = jnp.einsum('btc,ch->bth', h, layer['wv_t'], precision=hp).reshape(B, T, n_heads, head_size)
        att = jnp.einsum('bqhd,bkhd->bhqk', q, k, precision=hp) * scale
        att = jnp.where(causal[None, None], att, -jnp.inf)
        p = jax.nn.softmax(att, axis=-1)
        ctx = jnp.einsum('bhqk,bkhd->bqhd', p, v, precision=hp).reshape(B, T, -1)
        x = x + jnp.einsum('btc,cd->btd', ctx, layer['wo_t'], precision=hp) + layer['bo']
        h2 = _layernorm(x, layer['g2'], layer['be2'])
        hid = jnp.maximum(jnp.einsum('btc,cf->btf', h2, layer['w1_t'], precision=hp) + layer['b1'], 0.0)
        x = x + jnp.einsum('btf,fc->btc', hid, layer['w2_t'], precision=hp) + layer['b2']
    xf = _layernorm(x, P['gf'], P['bf'])
    logits = jnp.einsum('btc,cv->btv', xf, P['wh_t'], precision=hp) + P['bh']
    lse = jax.nn.logsumexp(logits, axis=-1)
    picked = jnp.take_along_axis(logits, targets[..., None], axis=-1)[..., 0]
    return logits, jnp.mean(lse - picked)


# ----------------------------------------------------------------------------
# Deterministic parameter init
# ----------------------------------------------------------------------------
def init_params(key, vocab, n_embed, block_size, n_layer):
    def nrm(k, shape, scale=0.02):
        return (scale * jax.random.normal(k, shape)).astype(jnp.float32)

    keys = iter(jax.random.split(key, 8 + 8 * n_layer))
    P = {
        'tok_embed': nrm(next(keys), (vocab, n_embed)),
        'pos_embed': nrm(next(keys), (block_size, n_embed)),
        'gf': jnp.ones((1, n_embed), jnp.float32),
        'bf': jnp.zeros((1, n_embed), jnp.float32),
        'wh_t': nrm(next(keys), (n_embed, vocab)),
        'bh': jnp.zeros((1, vocab), jnp.float32),
        'blocks': [],
    }
    for _ in range(n_layer):
        layer = {
            'g1': jnp.ones((1, n_embed), jnp.float32),
            'be1': jnp.zeros((1, n_embed), jnp.float32),
            'wq_t': nrm(next(keys), (n_embed, n_embed)),
            'wk_t': nrm(next(keys), (n_embed, n_embed)),
            'wv_t': nrm(next(keys), (n_embed, n_embed)),
            'wo_t': nrm(next(keys), (n_embed, n_embed)),
            'bo': jnp.zeros((1, n_embed), jnp.float32),
            'g2': jnp.ones((1, n_embed), jnp.float32),
            'be2': jnp.zeros((1, n_embed), jnp.float32),
            'w1_t': nrm(next(keys), (n_embed, 4 * n_embed)),
            'b1': jnp.zeros((1, 4 * n_embed), jnp.float32),
            'w2_t': nrm(next(keys), (4 * n_embed, n_embed)),
            'b2': jnp.zeros((1, n_embed), jnp.float32),
        }
        P['blocks'].append(layer)
    return P


if __name__ == "__main__":
    # small config consistent with the module
    vocab = 64          # len(tokenizer)
    n_embed = 32
    block_size = 8      # T
    n_heads = 4
    head_size = n_embed // n_heads
    n_layer = 2
    batch = 2
    # dropout = 0.0 -> identity (eval mode)

    root = jax.random.PRNGKey(0)
    kp, kt, kg = jax.random.split(root, 3)
    P = init_params(kp, vocab, n_embed, block_size, n_layer)
    tokens = jax.random.randint(kt, (batch, block_size), 0, vocab, dtype=jnp.int32)
    targets = jax.random.randint(kg, (batch, block_size), 0, vocab, dtype=jnp.int32)

    # jit the whole forward: param prep + embedding gathers + both pallas_calls + mean
    fwd = jax.jit(functools.partial(nano_gpt_forward,
                                    n_heads=n_heads, head_size=head_size, vocab=vocab))
    logits, loss = fwd(tokens, targets, P)
    jax.block_until_ready(logits)
    jax.block_until_ready(loss)

    # sanity check against pure-jnp f32 reference (kernel matmuls are bf16/f32-acc)
    ref_logits, ref_loss = ref_forward(tokens, targets, P, n_heads, head_size, vocab)
    assert logits.shape == (batch, block_size, vocab)
    assert jnp.allclose(logits, ref_logits, atol=2e-2, rtol=2e-2), \
        float(jnp.max(jnp.abs(logits - ref_logits)))
    assert jnp.allclose(loss, ref_loss, atol=2e-2, rtol=2e-2), \
        (float(loss), float(ref_loss))

    # TODO(synk): for GPT-2-scale configs, add a T-tile grid axis and a vocab-tile
    # grid axis (online logsumexp) so weight/logit tiles fit v7x's 64 MiB VMEM.
    print("KERNEL_OK")
</pallas_src>

<mosaic_0001>
module attributes {stable_mosaic.version = 11 : i64} {
  func.func @blocks_kernel(%arg0: i32, %arg1: i32, %arg2: memref<1x8x32xf32, #tpu.memory_space<vmem>>, %arg3: memref<1x1x32xf32, #tpu.memory_space<vmem>>, %arg4: memref<1x1x32xf32, #tpu.memory_space<vmem>>, %arg5: memref<1x32x96xbf16, #tpu.memory_space<vmem>>, %arg6: memref<1x32x32xbf16, #tpu.memory_space<vmem>>, %arg7: memref<1x1x32xf32, #tpu.memory_space<vmem>>, %arg8: memref<1x1x32xf32, #tpu.memory_space<vmem>>, %arg9: memref<1x1x32xf32, #tpu.memory_space<vmem>>, %arg10: memref<1x32x128xbf16, #tpu.memory_space<vmem>>, %arg11: memref<1x1x128xf32, #tpu.memory_space<vmem>>, %arg12: memref<1x128x32xbf16, #tpu.memory_space<vmem>>, %arg13: memref<1x1x32xf32, #tpu.memory_space<vmem>>, %arg14: memref<1x8x32xf32, #tpu.memory_space<vmem>>) attributes {dimension_semantics = [#tpu.dimension_semantics<parallel>, #tpu.dimension_semantics<arbitrary>], iteration_bounds = array<i64: 2, 2>, scalar_prefetch = 0 : i64, scratch_operands = 0 : i64, tpu.core_type = #tpu.core_type<tc>, window_params = [{transform_indices = @transform_0, window_bounds = array<i64: 1, 8, 32>}, {transform_indices = @transform_1, window_bounds = array<i64: 1, 1, 32>}, {transform_indices = @transform_2, window_bounds = array<i64: 1, 1, 32>}, {transform_indices = @transform_3, window_bounds = array<i64: 1, 32, 96>}, {transform_indices = @transform_4, window_bounds = array<i64: 1, 32, 32>}, {transform_indices = @transform_5, window_bounds = array<i64: 1, 1, 32>}, {transform_indices = @transform_6, window_bounds = array<i64: 1, 1, 32>}, {transform_indices = @transform_7, window_bounds = array<i64: 1, 1, 32>}, {transform_indices = @transform_8, window_bounds = array<i64: 1, 32, 128>}, {transform_indices = @transform_9, window_bounds = array<i64: 1, 1, 128>}, {transform_indices = @transform_10, window_bounds = array<i64: 1, 128, 32>}, {transform_indices = @transform_11, window_bounds = array<i64: 1, 1, 32>}, {transform_indices = @transform_12, window_bounds = array<i64: 1, 8, 32>}]} {
    %c0_i32 = arith.constant 0 : i32
    %0 = arith.cmpi eq, %arg1, %c0_i32 : i32
    %1 = arith.extui %0 : i1 to i32
    %c0_i32_0 = arith.constant 0 : i32
    %2 = arith.cmpi ne, %1, %c0_i32_0 : i32
    scf.if %2 {
      %c0_77 = arith.constant 0 : index
      %c0_78 = arith.constant 0 : index
      %c0_79 = arith.constant 0 : index
      %190 = vector.load %arg2[%c0_77, %c0_78, %c0_79] : memref<1x8x32xf32, #tpu.memory_space<vmem>>, vector<1x8x32xf32>
      %c0_80 = arith.constant 0 : index
      %c0_81 = arith.constant 0 : index
      %c0_82 = arith.constant 0 : index
      %191 = vector.load %arg14[%c0_80, %c0_81, %c0_82] : memref<1x8x32xf32, #tpu.memory_space<vmem>>, vector<1x8x32xf32>
      tpu.vector_store %arg14[%c0_80, %c0_81, %c0_82], %190 {strides = array<i32>} : memref<1x8x32xf32, #tpu.memory_space<vmem>>, vector<1x8x32xf32>,
    } else {
    }
    %c0 = arith.constant 0 : index
    %c0_1 = arith.constant 0 : index
    %c0_2 = arith.constant 0 : index
    %3 = vector.load %arg14[%c0, %c0_1, %c0_2] : memref<1x8x32xf32, #tpu.memory_space<vmem>>, vector<1x8x32xf32>
    %4 = vector.shape_cast %3 : vector<1x8x32xf32> to vector<8x32xf32>
    %c0_3 = arith.constant 0 : index
    %c0_4 = arith.constant 0 : index
    %c0_5 = arith.constant 0 : index
    %5 = vector.load %arg3[%c0_3, %c0_4, %c0_5] : memref<1x1x32xf32, #tpu.memory_space<vmem>>, vector<1x1x32xf32>
    %6 = vector.shape_cast %5 : vector<1x1x32xf32> to vector<1x32xf32>
    %c0_6 = arith.constant 0 : index
    %c0_7 = arith.constant 0 : index
    %c0_8 = arith.constant 0 : index
    %7 = vector.load %arg4[%c0_6, %c0_7, %c0_8] : memref<1x1x32xf32, #tpu.memory_space<vmem>>, vector<1x1x32xf32>
    %8 = vector.shape_cast %7 : vector<1x1x32xf32> to vector<1x32xf32>
    %cst = arith.constant dense<0.000000e+00> : vector<8xf32>
    %9 = vector.multi_reduction <add>, %4, %cst [1] : vector<8x32xf32> to vector<8xf32>
    %10 = vector.shape_cast %9 : vector<8xf32> to vector<8x1xf32>
    %cst_9 = arith.constant 3.200000e+01 : f32
    %11 = vector.broadcast %cst_9 : f32 to vector<8x1xf32>
    %12 = arith.divf %10, %11 : vector<8x1xf32>
    %13 = vector.broadcast %12 : vector<8x1xf32> to vector<8x32xf32>
    %14 = arith.subf %4, %13 : vector<8x32xf32>
    %15 = arith.mulf %14, %14 : vector<8x32xf32>
    %cst_10 = arith.constant dense<0.000000e+00> : vector<8xf32>
    %16 = vector.multi_reduction <add>, %15, %cst_10 [1] : vector<8x32xf32> to vector<8xf32>
    %17 = vector.shape_cast %16 : vector<8xf32> to vector<8x1xf32>
    %cst_11 = arith.constant 3.200000e+01 : f32
    %18 = vector.broadcast %cst_11 : f32 to vector<8x1xf32>
    %19 = arith.divf %17, %18 : vector<8x1xf32>
    %20 = vector.broadcast %12 : vector<8x1xf32> to vector<8x32xf32>
    %21 = arith.subf %4, %20 : vector<8x32xf32>
    %cst_12 = arith.constant 9.99999974E-6 : f32
    %22 = vector.broadcast %cst_12 : f32 to vector<8x1xf32>
    %23 = arith.addf %19, %22 : vector<8x1xf32>
    %24 = math.rsqrt %23 : vector<8x1xf32>
    %25 = vector.broadcast %24 : vector<8x1xf32> to vector<8x32xf32>
    %26 = arith.mulf %21, %25 : vector<8x32xf32>
    %27 = vector.broadcast %6 : vector<1x32xf32> to vector<8x32xf32>
    %28 = arith.mulf %26, %27 : vector<8x32xf32>
    %29 = vector.broadcast %8 : vector<1x32xf32> to vector<8x32xf32>
    %30 = arith.addf %28, %29 : vector<8x32xf32>
    %31 = arith.truncf %30 : vector<8x32xf32> to vector<8x32xbf16>
    %c0_13 = arith.constant 0 : index
    %c0_14 = arith.constant 0 : index
    %c0_15 = arith.constant 0 : index
    %32 = vector.load %arg5[%c0_13, %c0_14, %c0_15] : memref<1x32x96xbf16, #tpu.memory_space<vmem>>, vector<1x32x96xbf16>
    %33 = vector.shape_cast %32 : vector<1x32x96xbf16> to vector<32x96xbf16>
    %cst_16 = arith.constant dense<0.000000e+00> : vector<8x96xf32>
    %34 = tpu.matmul %31, %33, %cst_16 {dimension_numbers = #tpu.dot_dimension_numbers<[1], [0], [0], [1], [0, 0, 1, 1], [], []>} : vector<8x32xbf16>, vector<32x96xbf16>, vector<8x96xf32> -> vector<8x96xf32>
    %35 = vector.extract_strided_slice %34 {offsets = [0, 0], sizes = [8, 32], strides = [1, 1]} : vector<8x96xf32> to vector<8x32xf32>
    %36 = vector.extract_strided_slice %34 {offsets = [0, 32], sizes = [8, 32], strides = [1, 1]} : vector<8x96xf32> to vector<8x32xf32>
    %37 = vector.extract_strided_slice %34 {offsets = [0, 64], sizes = [8, 32], strides = [1, 1]} : vector<8x96xf32> to vector<8x32xf32>
    %38 = tpu.iota {dimensions = array<i32: 0>} : vector<8x8xi32>
    %39 = tpu.iota {dimensions = array<i32: 1>} : vector<8x8xi32>
    %40 = arith.cmpi sge, %38, %39 : vector<8x8xi32>
    %41 = vector.extract_strided_slice %35 {offsets = [0, 0], sizes = [8, 8], strides = [1, 1]} : vector<8x32xf32> to vector<8x8xf32>
    %42 = arith.truncf %41 : vector<8x8xf32> to vector<8x8xbf16>
    %43 = vector.extract_strided_slice %36 {offsets = [0, 0], sizes = [8, 8], strides = [1, 1]} : vector<8x32xf32> to vector<8x8xf32>
    %44 = arith.truncf %43 : vector<8x8xf32> to vector<8x8xbf16>
    %45 = vector.extract_strided_slice %37 {offsets = [0, 0], sizes = [8, 8], strides = [1, 1]} : vector<8x32xf32> to vector<8x8xf32>
    %46 = arith.truncf %45 : vector<8x8xf32> to vector<8x8xbf16>
    "tpu.trace_start"() <{level = 10 : i32, message = "qd,kd->qk"}> : () -> ()
    %cst_17 = arith.constant dense<0.000000e+00> : vector<8x8xf32>
    %47 = tpu.matmul %42, %44, %cst_17 {dimension_numbers = #tpu.dot_dimension_numbers<[1], [1], [0], [0], [0, 0, 1, 0], [], []>} : vector<8x8xbf16>, vector<8x8xbf16>, vector<8x8xf32> -> vector<8x8xf32>
    "tpu.trace_stop"() : () -> ()
    %cst_18 = arith.constant 0.353553385 : f32
    %48 = vector.broadcast %cst_18 : f32 to vector<8x8xf32>
    %49 = arith.mulf %47, %48 : vector<8x8xf32>
    %cst_19 = arith.constant -1.000000e+30 : f32
    %50 = vector.broadcast %cst_19 : f32 to vector<8x8xf32>
    %51 = arith.select %40, %49, %50 : vector<8x8xi1>, vector<8x8xf32>
    %cst_20 = arith.constant dense<0xFF800000> : vector<8xf32>
    %52 = vector.multi_reduction <maximumf>, %51, %cst_20 [1] : vector<8x8xf32> to vector<8xf32>
    %53 = vector.shape_cast %52 : vector<8xf32> to vector<8x1xf32>
    %54 = vector.broadcast %53 : vector<8x1xf32> to vector<8x8xf32>
    %55 = arith.subf %51, %54 : vector<8x8xf32>
    %56 = math.exp %55 : vector<8x8xf32>
    %cst_21 = arith.constant dense<0.000000e+00> : vector<8xf32>
    %57 = vector.multi_reduction <add>, %56, %cst_21 [1] : vector<8x8xf32> to vector<8xf32>
    %58 = vector.shape_cast %57 : vector<8xf32> to vector<8x1xf32>
    %59 = tpu.reciprocal %58 {approx = true} : vector<8x1xf32> -> vector<8x1xf32>
    %60 = vector.broadcast %59 : vector<8x1xf32> to vector<8x8xf32>
    %61 = arith.mulf %56, %60 : vector<8x8xf32>
    %62 = arith.truncf %61 : vector<8x8xf32> to vector<8x8xbf16>
    %cst_22 = arith.constant dense<0.000000e+00> : vector<8x8xf32>
    %63 = tpu.matmul %62, %46, %cst_22 {dimension_numbers = #tpu.dot_dimension_numbers<[1], [0], [0], [1], [0, 0, 1, 1], [], []>} : vector<8x8xbf16>, vector<8x8xbf16>, vector<8x8xf32> -> vector<8x8xf32>
    %64 = vector.extract_strided_slice %35 {offsets = [0, 8], sizes = [8, 8], strides = [1, 1]} : vector<8x32xf32> to vector<8x8xf32>
    %65 = arith.truncf %64 : vector<8x8xf32> to vector<8x8xbf16>
    %66 = vector.extract_strided_slice %36 {offsets = [0, 8], sizes = [8, 8], strides = [1, 1]} : vector<8x32xf32> to vector<8x8xf32>
    %67 = arith.truncf %66 : vector<8x8xf32> to vector<8x8xbf16>
    %68 = vector.extract_strided_slice %37 {offsets = [0, 8], sizes = [8, 8], strides = [1, 1]} : vector<8x32xf32> to vector<8x8xf32>
    %69 = arith.truncf %68 : vector<8x8xf32> to vector<8x8xbf16>
    "tpu.trace_start"() <{level = 10 : i32, message = "qd,kd->qk"}> : () -> ()
    %cst_23 = arith.constant dense<0.000000e+00> : vector<8x8xf32>
    %70 = tpu.matmul %65, %67, %cst_23 {dimension_numbers = #tpu.dot_dimension_numbers<[1], [1], [0], [0], [0, 0, 1, 0], [], []>} : vector<8x8xbf16>, vector<8x8xbf16>, vector<8x8xf32> -> vector<8x8xf32>
    "tpu.trace_stop"() : () -> ()
    %cst_24 = arith.constant 0.353553385 : f32
    %71 = vector.broadcast %cst_24 : f32 to vector<8x8xf32>
    %72 = arith.mulf %70, %71 : vector<8x8xf32>
    %cst_25 = arith.constant -1.000000e+30 : f32
    %73 = vector.broadcast %cst_25 : f32 to vector<8x8xf32>
    %74 = arith.select %40, %72, %73 : vector<8x8xi1>, vector<8x8xf32>
    %cst_26 = arith.constant dense<0xFF800000> : vector<8xf32>
    %75 = vector.multi_reduction <maximumf>, %74, %cst_26 [1] : vector<8x8xf32> to vector<8xf32>
    %76 = vector.shape_cast %75 : vector<8xf32> to vector<8x1xf32>
    %77 = vector.broadcast %76 : vector<8x1xf32> to vector<8x8xf32>
    %78 = arith.subf %74, %77 : vector<8x8xf32>
    %79 = math.exp %78 : vector<8x8xf32>
    %cst_27 = arith.constant dense<0.000000e+00> : vector<8xf32>
    %80 = vector.multi_reduction <add>, %79, %cst_27 [1] : vector<8x8xf32> to vector<8xf32>
    %81 = vector.shape_cast %80 : vector<8xf32> to vector<8x1xf32>
    %82 = tpu.reciprocal %81 {approx = true} : vector<8x1xf32> -> vector<8x1xf32>
    %83 = vector.broadcast %82 : vector<8x1xf32> to vector<8x8xf32>
    %84 = arith.mulf %79, %83 : vector<8x8xf32>
    %85 = arith.truncf %84 : vector<8x8xf32> to vector<8x8xbf16>
    %cst_28 = arith.constant dense<0.000000e+00> : vector<8x8xf32>
    %86 = tpu.matmul %85, %69, %cst_28 {dimension_numbers = #tpu.dot_dimension_numbers<[1], [0], [0], [1], [0, 0, 1, 1], [], []>} : vector<8x8xbf16>, vector<8x8xbf16>, vector<8x8xf32> -> vector<8x8xf32>
    %87 = vector.extract_strided_slice %35 {offsets = [0, 16], sizes = [8, 8], strides = [1, 1]} : vector<8x32xf32> to vector<8x8xf32>
    %88 = arith.truncf %87 : vector<8x8xf32> to vector<8x8xbf16>
    %89 = vector.extract_strided_slice %36 {offsets = [0, 16], sizes = [8, 8], strides = [1, 1]} : vector<8x32xf32> to vector<8x8xf32>
    %90 = arith.truncf %89 : vector<8x8xf32> to vector<8x8xbf16>
    %91 = vector.extract_strided_slice %37 {offsets = [0, 16], sizes = [8, 8], strides = [1, 1]} : vector<8x32xf32> to vector<8x8xf32>
    %92 = arith.truncf %91 : vector<8x8xf32> to vector<8x8xbf16>
    "tpu.trace_start"() <{level = 10 : i32, message = "qd,kd->qk"}> : () -> ()
    %cst_29 = arith.constant dense<0.000000e+00> : vector<8x8xf32>
    %93 = tpu.matmul %88, %90, %cst_29 {dimension_numbers = #tpu.dot_dimension_numbers<[1], [1], [0], [0], [0, 0, 1, 0], [], []>} : vector<8x8xbf16>, vector<8x8xbf16>, vector<8x8xf32> -> vector<8x8xf32>
    "tpu.trace_stop"() : () -> ()
    %cst_30 = arith.constant 0.353553385 : f32
    %94 = vector.broadcast %cst_30 : f32 to vector<8x8xf32>
    %95 = arith.mulf %93, %94 : vector<8x8xf32>
    %cst_31 = arith.constant -1.000000e+30 : f32
    %96 = vector.broadcast %cst_31 : f32 to vector<8x8xf32>
    %97 = arith.select %40, %95, %96 : vector<8x8xi1>, vector<8x8xf32>
    %cst_32 = arith.constant dense<0xFF800000> : vector<8xf32>
    %98 = vector.multi_reduction <maximumf>, %97, %cst_32 [1] : vector<8x8xf32> to vector<8xf32>
    %99 = vector.shape_cast %98 : vector<8xf32> to vector<8x1xf32>
    %100 = vector.broadcast %99 : vector<8x1xf32> to vector<8x8xf32>
    %101 = arith.subf %97, %100 : vector<8x8xf32>
    %102 = math.exp %101 : vector<8x8xf32>
    %cst_33 = arith.constant dense<0.000000e+00> : vector<8xf32>
    %103 = vector.multi_reduction <add>, %102, %cst_33 [1] : vector<8x8xf32> to vector<8xf32>
    %104 = vector.shape_cast %103 : vector<8xf32> to vector<8x1xf32>
    %105 = tpu.reciprocal %104 {approx = true} : vector<8x1xf32> -> vector<8x1xf32>
    %106 = vector.broadcast %105 : vector<8x1xf32> to vector<8x8xf32>
    %107 = arith.mulf %102, %106 : vector<8x8xf32>
    %108 = arith.truncf %107 : vector<8x8xf32> to vector<8x8xbf16>
    %cst_34 = arith.constant dense<0.000000e+00> : vector<8x8xf32>
    %109 = tpu.matmul %108, %92, %cst_34 {dimension_numbers = #tpu.dot_dimension_numbers<[1], [0], [0], [1], [0, 0, 1, 1], [], []>} : vector<8x8xbf16>, vector<8x8xbf16>, vector<8x8xf32> -> vector<8x8xf32>
    %110 = vector.extract_strided_slice %35 {offsets = [0, 24], sizes = [8, 8], strides = [1, 1]} : vector<8x32xf32> to vector<8x8xf32>
    %111 = arith.truncf %110 : vector<8x8xf32> to vector<8x8xbf16>
    %112 = vector.extract_strided_slice %36 {offsets = [0, 24], sizes = [8, 8], strides = [1, 1]} : vector<8x32xf32> to vector<8x8xf32>
    %113 = arith.truncf %112 : vector<8x8xf32> to vector<8x8xbf16>
    %114 = vector.extract_strided_slice %37 {offsets = [0, 24], sizes = [8, 8], strides = [1, 1]} : vector<8x32xf32> to vector<8x8xf32>
    %115 = arith.truncf %114 : vector<8x8xf32> to vector<8x8xbf16>
    "tpu.trace_start"() <{level = 10 : i32, message = "qd,kd->qk"}> : () -> ()
    %cst_35 = arith.constant dense<0.000000e+00> : vector<8x8xf32>
    %116 = tpu.matmul %111, %113, %cst_35 {dimension_numbers = #tpu.dot_dimension_numbers<[1], [1], [0], [0], [0, 0, 1, 0], [], []>} : vector<8x8xbf16>, vector<8x8xbf16>, vector<8x8xf32> -> vector<8x8xf32>
    "tpu.trace_stop"() : () -> ()
    %cst_36 = arith.constant 0.353553385 : f32
    %117 = vector.broadcast %cst_36 : f32 to vector<8x8xf32>
    %118 = arith.mulf %116, %117 : vector<8x8xf32>
    %cst_37 = arith.constant -1.000000e+30 : f32
    %119 = vector.broadcast %cst_37 : f32 to vector<8x8xf32>
    %120 = arith.select %40, %118, %119 : vector<8x8xi1>, vector<8x8xf32>
    %cst_38 = arith.constant dense<0xFF800000> : vector<8xf32>
    %121 = vector.multi_reduction <maximumf>, %120, %cst_38 [1] : vector<8x8xf32> to vector<8xf32>
    %122 = vector.shape_cast %121 : vector<8xf32> to vector<8x1xf32>
    %123 = vector.broadcast %122 : vector<8x1xf32> to vector<8x8xf32>
    %124 = arith.subf %120, %123 : vector<8x8xf32>
    %125 = math.exp %124 : vector<8x8xf32>
    %cst_39 = arith.constant dense<0.000000e+00> : vector<8xf32>
    %126 = vector.multi_reduction <add>, %125, %cst_39 [1] : vector<8x8xf32> to vector<8xf32>
    %127 = vector.shape_cast %126 : vector<8xf32> to vector<8x1xf32>
    %128 = tpu.reciprocal %127 {approx = true} : vector<8x1xf32> -> vector<8x1xf32>
    %129 = vector.broadcast %128 : vector<8x1xf32> to vector<8x8xf32>
    %130 = arith.mulf %125, %129 : vector<8x8xf32>
    %131 = arith.truncf %130 : vector<8x8xf32> to vector<8x8xbf16>
    %cst_40 = arith.constant dense<0.000000e+00> : vector<8x8xf32>
    %132 = tpu.matmul %131, %115, %cst_40 {dimension_numbers = #tpu.dot_dimension_numbers<[1], [0], [0], [1], [0, 0, 1, 1], [], []>} : vector<8x8xbf16>, vector<8x8xbf16>, vector<8x8xf32> -> vector<8x8xf32>
    %133 = tpu.concatenate %63, %86, %109, %132 in 1 : vector<8x8xf32>, vector<8x8xf32>, vector<8x8xf32>, vector<8x8xf32> -> vector<8x32xf32>
    %134 = arith.truncf %133 : vector<8x32xf32> to vector<8x32xbf16>
    %c0_41 = arith.constant 0 : index
    %c0_42 = arith.constant 0 : index
    %c0_43 = arith.constant 0 : index
    %135 = vector.load %arg6[%c0_41, %c0_42, %c0_43] : memref<1x32x32xbf16, #tpu.memory_space<vmem>>, vector<1x32x32xbf16>
    %136 = vector.shape_cast %135 : vector<1x32x32xbf16> to vector<32x32xbf16>
    %cst_44 = arith.constant dense<0.000000e+00> : vector<8x32xf32>
    %137 = tpu.matmul %134, %136, %cst_44 {dimension_numbers = #tpu.dot_dimension_numbers<[1], [0], [0], [1], [0, 0, 1, 1], [], []>} : vector<8x32xbf16>, vector<32x32xbf16>, vector<8x32xf32> -> vector<8x32xf32>
    %c0_45 = arith.constant 0 : index
    %c0_46 = arith.constant 0 : index
    %c0_47 = arith.constant 0 : index
    %138 = vector.load %arg7[%c0_45, %c0_46, %c0_47] : memref<1x1x32xf32, #tpu.memory_space<vmem>>, vector<1x1x32xf32>
    %139 = vector.shape_cast %138 : vector<1x1x32xf32> to vector<1x32xf32>
    %140 = vector.broadcast %139 : vector<1x32xf32> to vector<8x32xf32>
    %141 = arith.addf %137, %140 : vector<8x32xf32>
    %142 = arith.addf %4, %141 : vector<8x32xf32>
    %c0_48 = arith.constant 0 : index
    %c0_49 = arith.constant 0 : index
    %c0_50 = arith.constant 0 : index
    %143 = vector.load %arg8[%c0_48, %c0_49, %c0_50] : memref<1x1x32xf32, #tpu.memory_space<vmem>>, vector<1x1x32xf32>
    %144 = vector.shape_cast %143 : vector<1x1x32xf32> to vector<1x32xf32>
    %c0_51 = arith.constant 0 : index
    %c0_52 = arith.constant 0 : index
    %c0_53 = arith.constant 0 : index
    %145 = vector.load %arg9[%c0_51, %c0_52, %c0_53] : memref<1x1x32xf32, #tpu.memory_space<vmem>>, vector<1x1x32xf32>
    %146 = vector.shape_cast %145 : vector<1x1x32xf32> to vector<1x32xf32>
    %cst_54 = arith.constant dense<0.000000e+00> : vector<8xf32>
    %147 = vector.multi_reduction <add>, %142, %cst_54 [1] : vector<8x32xf32> to vector<8xf32>
    %148 = vector.shape_cast %147 : vector<8xf32> to vector<8x1xf32>
    %cst_55 = arith.constant 3.200000e+01 : f32
    %149 = vector.broadcast %cst_55 : f32 to vector<8x1xf32>
    %150 = arith.divf %148, %149 : vector<8x1xf32>
    %151 = vector.broadcast %150 : vector<8x1xf32> to vector<8x32xf32>
    %152 = arith.subf %142, %151 : vector<8x32xf32>
    %153 = arith.mulf %152, %152 : vector<8x32xf32>
    %cst_56 = arith.constant dense<0.000000e+00> : vector<8xf32>
    %154 = vector.multi_reduction <add>, %153, %cst_56 [1] : vector<8x32xf32> to vector<8xf32>
    %155 = vector.shape_cast %154 : vector<8xf32> to vector<8x1xf32>
    %cst_57 = arith.constant 3.200000e+01 : f32
    %156 = vector.broadcast %cst_57 : f32 to vector<8x1xf32>
    %157 = arith.divf %155, %156 : vector<8x1xf32>
    %158 = vector.broadcast %150 : vector<8x1xf32> to vector<8x32xf32>
    %159 = arith.subf %142, %158 : vector<8x32xf32>
    %cst_58 = arith.constant 9.99999974E-6 : f32
    %160 = vector.broadcast %cst_58 : f32 to vector<8x1xf32>
    %161 = arith.addf %157, %160 : vector<8x1xf32>
    %162 = math.rsqrt %161 : vector<8x1xf32>
    %163 = vector.broadcast %162 : vector<8x1xf32> to vector<8x32xf32>
    %164 = arith.mulf %159, %163 : vector<8x32xf32>
    %165 = vector.broadcast %144 : vector<1x32xf32> to vector<8x32xf32>
    %166 = arith.mulf %164, %165 : vector<8x32xf32>
    %167 = vector.broadcast %146 : vector<1x32xf32> to vector<8x32xf32>
    %168 = arith.addf %166, %167 : vector<8x32xf32>
    %169 = arith.truncf %168 : vector<8x32xf32> to vector<8x32xbf16>
    %c0_59 = arith.constant 0 : index
    %c0_60 = arith.constant 0 : index
    %c0_61 = arith.constant 0 : index
    %170 = vector.load %arg10[%c0_59, %c0_60, %c0_61] : memref<1x32x128xbf16, #tpu.memory_space<vmem>>, vector<1x32x128xbf16>
    %171 = vector.shape_cast %170 : vector<1x32x128xbf16> to vector<32x128xbf16>
    %cst_62 = arith.constant dense<0.000000e+00> : vector<8x128xf32>
    %172 = tpu.matmul %169, %171, %cst_62 {dimension_numbers = #tpu.dot_dimension_numbers<[1], [0], [0], [1], [0, 0, 1, 1], [], []>} : vector<8x32xbf16>, vector<32x128xbf16>, vector<8x128xf32> -> vector<8x128xf32>
    %c0_63 = arith.constant 0 : index
    %c0_64 = arith.constant 0 : index
    %c0_65 = arith.constant 0 : index
    %173 = vector.load %arg11[%c0_63, %c0_64, %c0_65] : memref<1x1x128xf32, #tpu.memory_space<vmem>>, vector<1x1x128xf32>
    %174 = vector.shape_cast %173 : vector<1x1x128xf32> to vector<1x128xf32>
    %175 = vector.broadcast %174 : vector<1x128xf32> to vector<8x128xf32>
    %176 = arith.addf %172, %175 : vector<8x128xf32>
    %cst_66 = arith.constant 0.000000e+00 : f32
    %177 = vector.broadcast %cst_66 : f32 to vector<8x128xf32>
    %178 = arith.maximumf %176, %177 : vector<8x128xf32>
    %179 = arith.truncf %178 : vector<8x128xf32> to vector<8x128xbf16>
    %c0_67 = arith.constant 0 : index
    %c0_68 = arith.constant 0 : index
    %c0_69 = arith.constant 0 : index
    %180 = vector.load %arg12[%c0_67, %c0_68, %c0_69] : memref<1x128x32xbf16, #tpu.memory_space<vmem>>, vector<1x128x32xbf16>
    %181 = vector.shape_cast %180 : vector<1x128x32xbf16> to vector<128x32xbf16>
    %cst_70 = arith.constant dense<0.000000e+00> : vector<8x32xf32>
    %182 = tpu.matmul %179, %181, %cst_70 {dimension_numbers = #tpu.dot_dimension_numbers<[1], [0], [0], [1], [0, 0, 1, 1], [], []>} : vector<8x128xbf16>, vector<128x32xbf16>, vector<8x32xf32> -> vector<8x32xf32>
    %c0_71 = arith.constant 0 : index
    %c0_72 = arith.constant 0 : index
    %c0_73 = arith.constant 0 : index
    %183 = vector.load %arg13[%c0_71, %c0_72, %c0_73] : memref<1x1x32xf32, #tpu.memory_space<vmem>>, vector<1x1x32xf32>
    %184 = vector.shape_cast %183 : vector<1x1x32xf32> to vector<1x32xf32>
    %185 = vector.broadcast %184 : vector<1x32xf32> to vector<8x32xf32>
    %186 = arith.addf %182, %185 : vector<8x32xf32>
    %187 = arith.addf %142, %186 : vector<8x32xf32>
    %188 = vector.shape_cast %187 : vector<8x32xf32> to vector<1x8x32xf32>
    %c0_74 = arith.constant 0 : index
    %c0_75 = arith.constant 0 : index
    %c0_76 = arith.constant 0 : index
    %189 = vector.load %arg14[%c0_74, %c0_75, %c0_76] : memref<1x8x32xf32, #tpu.memory_space<vmem>>, vector<1x8x32xf32>
    tpu.vector_store %arg14[%c0_74, %c0_75, %c0_76], %188 {strides = array<i32>} : memref<1x8x32xf32, #tpu.memory_space<vmem>>, vector<1x8x32xf32>,
    return
  }
  func.func @transform_0(%arg0: i32, %arg1: i32) -> (i32, i32, i32) {
    %c0_i32 = arith.constant 0 : i32
    %c0_i32_0 = arith.constant 0 : i32
    %c0_i32_1 = arith.constant 0 : i32
    return %arg0, %c0_i32, %c0_i32_0 : i32, i32, i32
  }
  func.func @transform_1(%arg0: i32, %arg1: i32) -> (i32, i32, i32) {
    %c0_i32 = arith.constant 0 : i32
    %c0_i32_0 = arith.constant 0 : i32
    %c0_i32_1 = arith.constant 0 : i32
    return %arg1, %c0_i32, %c0_i32_0 : i32, i32, i32
  }
  func.func @transform_2(%arg0: i32, %arg1: i32) -> (i32, i32, i32) {
    %c0_i32 = arith.constant 0 : i32
    %c0_i32_0 = arith.constant 0 : i32
    %c0_i32_1 = arith.constant 0 : i32
    return %arg1, %c0_i32, %c0_i32_0 : i32, i32, i32
  }
  func.func @transform_3(%arg0: i32, %arg1: i32) -> (i32, i32, i32) {
    %c0_i32 = arith.constant 0 : i32
    %c0_i32_0 = arith.constant 0 : i32
    %c0_i32_1 = arith.constant 0 : i32
    return %arg1, %c0_i32, %c0_i32_0 : i32, i32, i32
  }
  func.func @transform_4(%arg0: i32, %arg1: i32) -> (i32, i32, i32) {
    %c0_i32 = arith.constant 0 : i32
    %c0_i32_0 = arith.constant 0 : i32
    %c0_i32_1 = arith.constant 0 : i32
    return %arg1, %c0_i32, %c0_i32_0 : i32, i32, i32
  }
  func.func @transform_5(%arg0: i32, %arg1: i32) -> (i32, i32, i32) {
    %c0_i32 = arith.constant 0 : i32
    %c0_i32_0 = arith.constant 0 : i32
    %c0_i32_1 = arith.constant 0 : i32
    return %arg1, %c0_i32, %c0_i32_0 : i32, i32, i32
  }
  func.func @transform_6(%arg0: i32, %arg1: i32) -> (i32, i32, i32) {
    %c0_i32 = arith.constant 0 : i32
    %c0_i32_0 = arith.constant 0 : i32
    %c0_i32_1 = arith.constant 0 : i32
    return %arg1, %c0_i32, %c0_i32_0 : i32, i32, i32
  }
  func.func @transform_7(%arg0: i32, %arg1: i32) -> (i32, i32, i32) {
    %c0_i32 = arith.constant 0 : i32
    %c0_i32_0 = arith.constant 0 : i32
    %c0_i32_1 = arith.constant 0 : i32
    return %arg1, %c0_i32, %c0_i32_0 : i32, i32, i32
  }
  func.func @transform_8(%arg0: i32, %arg1: i32) -> (i32, i32, i32) {
    %c0_i32 = arith.constant 0 : i32
    %c0_i32_0 = arith.constant 0 : i32
    %c0_i32_1 = arith.constant 0 : i32
    return %arg1, %c0_i32, %c0_i32_0 : i32, i32, i32
  }
  func.func @transform_9(%arg0: i32, %arg1: i32) -> (i32, i32, i32) {
    %c0_i32 = arith.constant 0 : i32
    %c0_i32_0 = arith.constant 0 : i32
    %c0_i32_1 = arith.constant 0 : i32
    return %arg1, %c0_i32, %c0_i32_0 : i32, i32, i32
  }
  func.func @transform_10(%arg0: i32, %arg1: i32) -> (i32, i32, i32) {
    %c0_i32 = arith.constant 0 : i32
    %c0_i32_0 = arith.constant 0 : i32
    %c0_i32_1 = arith.constant 0 : i32
    return %arg1, %c0_i32, %c0_i32_0 : i32, i32, i32
  }
  func.func @transform_11(%arg0: i32, %arg1: i32) -> (i32, i32, i32) {
    %c0_i32 = arith.constant 0 : i32
    %c0_i32_0 = arith.constant 0 : i32
    %c0_i32_1 = arith.constant 0 : i32
    return %arg1, %c0_i32, %c0_i32_0 : i32, i32, i32
  }
  func.func @transform_12(%arg0: i32, %arg1: i32) -> (i32, i32, i32) {
    %c0_i32 = arith.constant 0 : i32
    %c0_i32_0 = arith.constant 0 : i32
    %c0_i32_1 = arith.constant 0 : i32
    return %arg0, %c0_i32, %c0_i32_0 : i32, i32, i32
  }
}

module attributes {stable_mosaic.version = 11 : i64} {
  func.func @head_loss_kernel(%arg0: i32, %arg1: memref<1x8x32xf32, #tpu.memory_space<vmem>>, %arg2: memref<1x32xf32, #tpu.memory_space<vmem>>, %arg3: memref<1x32xf32, #tpu.memory_space<vmem>>, %arg4: memref<32x128xbf16, #tpu.memory_space<vmem>>, %arg5: memref<1x128xf32, #tpu.memory_space<vmem>>, %arg6: memref<1x8x1xi32, #tpu.memory_space<vmem>>, %arg7: memref<1x8x128xf32, #tpu.memory_space<vmem>>, %arg8: memref<1x8x1xf32, #tpu.memory_space<vmem>>) attributes {dimension_semantics = [#tpu.dimension_semantics<parallel>], iteration_bounds = array<i64: 2>, scalar_prefetch = 0 : i64, scratch_operands = 0 : i64, tpu.core_type = #tpu.core_type<tc>, window_params = [{transform_indices = @transform_0, window_bounds = array<i64: 1, 8, 32>}, {pipeline_mode = #tpu.pipeline_mode<synchronous>, transform_indices = @transform_1, window_bounds = array<i64: 1, 32>}, {pipeline_mode = #tpu.pipeline_mode<synchronous>, transform_indices = @transform_2, window_bounds = array<i64: 1, 32>}, {pipeline_mode = #tpu.pipeline_mode<synchronous>, transform_indices = @transform_3, window_bounds = array<i64: 32, 128>}, {pipeline_mode = #tpu.pipeline_mode<synchronous>, transform_indices = @transform_4, window_bounds = array<i64: 1, 128>}, {transform_indices = @transform_5, window_bounds = array<i64: 1, 8, 1>}, {transform_indices = @transform_6, window_bounds = array<i64: 1, 8, 128>}, {transform_indices = @transform_7, window_bounds = array<i64: 1, 8, 1>}]} {
    %c0 = arith.constant 0 : index
    %c0_0 = arith.constant 0 : index
    %c0_1 = arith.constant 0 : index
    %0 = vector.load %arg1[%c0, %c0_0, %c0_1] : memref<1x8x32xf32, #tpu.memory_space<vmem>>, vector<1x8x32xf32>
    %1 = vector.shape_cast %0 : vector<1x8x32xf32> to vector<8x32xf32>
    %c0_2 = arith.constant 0 : index
    %c0_3 = arith.constant 0 : index
    %2 = vector.load %arg2[%c0_2, %c0_3] : memref<1x32xf32, #tpu.memory_space<vmem>>, vector<1x32xf32>
    %c0_4 = arith.constant 0 : index
    %c0_5 = arith.constant 0 : index
    %3 = vector.load %arg3[%c0_4, %c0_5] : memref<1x32xf32, #tpu.memory_space<vmem>>, vector<1x32xf32>
    %cst = arith.constant dense<0.000000e+00> : vector<8xf32>
    %4 = vector.multi_reduction <add>, %1, %cst [1] : vector<8x32xf32> to vector<8xf32>
    %5 = vector.shape_cast %4 : vector<8xf32> to vector<8x1xf32>
    %cst_6 = arith.constant 3.200000e+01 : f32
    %6 = vector.broadcast %cst_6 : f32 to vector<8x1xf32>
    %7 = arith.divf %5, %6 : vector<8x1xf32>
    %8 = vector.broadcast %7 : vector<8x1xf32> to vector<8x32xf32>
    %9 = arith.subf %1, %8 : vector<8x32xf32>
    %10 = arith.mulf %9, %9 : vector<8x32xf32>
    %cst_7 = arith.constant dense<0.000000e+00> : vector<8xf32>
    %11 = vector.multi_reduction <add>, %10, %cst_7 [1] : vector<8x32xf32> to vector<8xf32>
    %12 = vector.shape_cast %11 : vector<8xf32> to vector<8x1xf32>
    %cst_8 = arith.constant 3.200000e+01 : f32
    %13 = vector.broadcast %cst_8 : f32 to vector<8x1xf32>
    %14 = arith.divf %12, %13 : vector<8x1xf32>
    %15 = vector.broadcast %7 : vector<8x1xf32> to vector<8x32xf32>
    %16 = arith.subf %1, %15 : vector<8x32xf32>
    %cst_9 = arith.constant 9.99999974E-6 : f32
    %17 = vector.broadcast %cst_9 : f32 to vector<8x1xf32>
    %18 = arith.addf %14, %17 : vector<8x1xf32>
    %19 = math.rsqrt %18 : vector<8x1xf32>
    %20 = vector.broadcast %19 : vector<8x1xf32> to vector<8x32xf32>
    %21 = arith.mulf %16, %20 : vector<8x32xf32>
    %22 = vector.broadcast %2 : vector<1x32xf32> to vector<8x32xf32>
    %23 = arith.mulf %21, %22 : vector<8x32xf32>
    %24 = vector.broadcast %3 : vector<1x32xf32> to vector<8x32xf32>
    %25 = arith.addf %23, %24 : vector<8x32xf32>
    %26 = arith.truncf %25 : vector<8x32xf32> to vector<8x32xbf16>
    %c0_10 = arith.constant 0 : index
    %c0_11 = arith.constant 0 : index
    %27 = vector.load %arg4[%c0_10, %c0_11] : memref<32x128xbf16, #tpu.memory_space<vmem>>, vector<32x128xbf16>
    %cst_12 = arith.constant dense<0.000000e+00> : vector<8x128xf32>
    %28 = tpu.matmul %26, %27, %cst_12 {dimension_numbers = #tpu.dot_dimension_numbers<[1], [0], [0], [1], [0, 0, 1, 1], [], []>} : vector<8x32xbf16>, vector<32x128xbf16>, vector<8x128xf32> -> vector<8x128xf32>
    %c0_13 = arith.constant 0 : index
    %c0_14 = arith.constant 0 : index
    %29 = vector.load %arg5[%c0_13, %c0_14] : memref<1x128xf32, #tpu.memory_space<vmem>>, vector<1x128xf32>
    %30 = vector.broadcast %29 : vector<1x128xf32> to vector<8x128xf32>
    %31 = arith.addf %28, %30 : vector<8x128xf32>
    %32 = vector.shape_cast %31 : vector<8x128xf32> to vector<1x8x128xf32>
    %c0_15 = arith.constant 0 : index
    %c0_16 = arith.constant 0 : index
    %c0_17 = arith.constant 0 : index
    %33 = vector.load %arg7[%c0_15, %c0_16, %c0_17] : memref<1x8x128xf32, #tpu.memory_space<vmem>>, vector<1x8x128xf32>
    tpu.vector_store %arg7[%c0_15, %c0_16, %c0_17], %32 {strides = array<i32>} : memref<1x8x128xf32, #tpu.memory_space<vmem>>, vector<1x8x128xf32>,
    %cst_18 = arith.constant dense<0xFF800000> : vector<8xf32>
    %34 = vector.multi_reduction <maximumf>, %31, %cst_18 [1] : vector<8x128xf32> to vector<8xf32>
    %35 = vector.shape_cast %34 : vector<8xf32> to vector<8x1xf32>
    %36 = vector.broadcast %35 : vector<8x1xf32> to vector<8x128xf32>
    %37 = arith.subf %31, %36 : vector<8x128xf32>
    %38 = math.exp %37 : vector<8x128xf32>
    %cst_19 = arith.constant dense<0.000000e+00> : vector<8xf32>
    %39 = vector.multi_reduction <add>, %38, %cst_19 [1] : vector<8x128xf32> to vector<8xf32>
    %40 = vector.shape_cast %39 : vector<8xf32> to vector<8x1xf32>
    %41 = math.log %40 : vector<8x1xf32>
    %42 = arith.addf %35, %41 : vector<8x1xf32>
    %c0_20 = arith.constant 0 : index
    %c0_21 = arith.constant 0 : index
    %c0_22 = arith.constant 0 : index
    %43 = vector.load %arg6[%c0_20, %c0_21, %c0_22] : memref<1x8x1xi32, #tpu.memory_space<vmem>>, vector<1x8x1xi32>
    %44 = vector.shape_cast %43 : vector<1x8x1xi32> to vector<8x1xi32>
    %45 = tpu.iota {dimensions = array<i32: 1>} : vector<8x128xi32>
    %46 = vector.broadcast %44 : vector<8x1xi32> to vector<8x128xi32>
    %47 = arith.cmpi eq, %45, %46 : vector<8x128xi32>
    %cst_23 = arith.constant 0.000000e+00 : f32
    %48 = vector.broadcast %cst_23 : f32 to vector<8x128xf32>
    %49 = arith.select %47, %31, %48 : vector<8x128xi1>, vector<8x128xf32>
    %cst_24 = arith.constant dense<0.000000e+00> : vector<8xf32>
    %50 = vector.multi_reduction <add>, %49, %cst_24 [1] : vector<8x128xf32> to vector<8xf32>
    %51 = vector.shape_cast %50 : vector<8xf32> to vector<8x1xf32>
    %52 = arith.subf %42, %51 : vector<8x1xf32>
    %53 = vector.shape_cast %52 : vector<8x1xf32> to vector<1x8x1xf32>
    %c0_25 = arith.constant 0 : index
    %c0_26 = arith.constant 0 : index
    %c0_27 = arith.constant 0 : index
    %54 = vector.load %arg8[%c0_25, %c0_26, %c0_27] : memref<1x8x1xf32, #tpu.memory_space<vmem>>, vector<1x8x1xf32>
    tpu.vector_store %arg8[%c0_25, %c0_26, %c0_27], %53 {strides = array<i32>} : memref<1x8x1xf32, #tpu.memory_space<vmem>>, vector<1x8x1xf32>,
    return
  }
  func.func @transform_0(%arg0: i32) -> (i32, i32, i32) {
    %c0_i32 = arith.constant 0 : i32
    %c0_i32_0 = arith.constant 0 : i32
    %c0_i32_1 = arith.constant 0 : i32
    return %arg0, %c0_i32, %c0_i32_0 : i32, i32, i32
  }
  func.func @transform_1(%arg0: i32) -> (i32, i32) {
    %c0_i32 = arith.constant 0 : i32
    %c0_i32_0 = arith.constant 0 : i32
    %c0_i32_1 = arith.constant 0 : i32
    return %c0_i32, %c0_i32_0 : i32, i32
  }
  func.func @transform_2(%arg0: i32) -> (i32, i32) {
    %c0_i32 = arith.constant 0 : i32
    %c0_i32_0 = arith.constant 0 : i32
    %c0_i32_1 = arith.constant 0 : i32
    return %c0_i32, %c0_i32_0 : i32, i32
  }
  func.func @transform_3(%arg0: i32) -> (i32, i32) {
    %c0_i32 = arith.constant 0 : i32
    %c0_i32_0 = arith.constant 0 : i32
    %c0_i32_1 = arith.constant 0 : i32
    return %c0_i32, %c0_i32_0 : i32, i32
  }
  func.func @transform_4(%arg0: i32) -> (i32, i32) {
    %c0_i32 = arith.constant 0 : i32
    %c0_i32_0 = arith.constant 0 : i32
    %c0_i32_1 = arith.constant 0 : i32
    return %c0_i32, %c0_i32_0 : i32, i32
  }
  func.func @transform_5(%arg0: i32) -> (i32, i32, i32) {
    %c0_i32 = arith.constant 0 : i32
    %c0_i32_0 = arith.constant 0 : i32
    %c0_i32_1 = arith.constant 0 : i32
    return %arg0, %c0_i32, %c0_i32_0 : i32, i32, i32
  }
  func.func @transform_6(%arg0: i32) -> (i32, i32, i32) {
    %c0_i32 = arith.constant 0 : i32
    %c0_i32_0 = arith.constant 0 : i32
    %c0_i32_1 = arith.constant 0 : i32
    return %arg0, %c0_i32, %c0_i32_0 : i32, i32, i32
  }
  func.func @transform_7(%arg0: i32) -> (i32, i32, i32) {
    %c0_i32 = arith.constant 0 : i32
    %c0_i32_0 = arith.constant 0 : i32
    %c0_i32_1 = arith.constant 0 : i32
    return %arg0, %c0_i32, %c0_i32_0 : i32, i32, i32
  }
}

</mosaic_0001>

<llo_original>
// kernel: nano_gpt_forward.3
$region0: #{nano_gpt_forward.3}
  #allocation0 [shape = 'u32[]', space=smem, size = 0x4, offset = 0x4, fixed_abs, tag = 'smem constant byte address 0x4 - core index']
  #allocation1 [shape = 'u32[144,128]{1,0:T(1,128)}', space=vmem, size = 0x12000, scoped, tag = 'internal scratch']
  %s0 = inlined_call_operand.vmem [shape: f32[2,8,32], index: 0, kind: input, shape index: {}]
  %s1 = inlined_call_operand.vmem [shape: f32[1,32], index: 1, kind: input, shape index: {}]
  %s2 = inlined_call_operand.vmem [shape: f32[1,32], index: 2, kind: input, shape index: {}]
  %s3 = inlined_call_operand.vmem [shape: bf16[32,128], index: 3, kind: input, shape index: {}]
  %s4 = inlined_call_operand.vmem [shape: f32[1,128], index: 4, kind: input, shape index: {}]
  %s5 = inlined_call_operand.vmem [shape: s32[2,8,1], index: 5, kind: input, shape index: {}]
  %s6 = inlined_call_operand.hbm [shape: f32[2,8,128], index: 6, kind: output, shape index: {0}]
  %s7 = inlined_call_operand.vmem [shape: f32[2,8,1], index: 7, kind: output, shape index: {1}]
  %8 = xla_tuple %s6, %s7
  %s9 = sld [smem:[#allocation0]]
  $region65: #{nano_gpt_forward.3} parent=0
    _
  %s11 = ssub.s32 1, %s9
  %s12 = scalar_select 0, %s11, %s9
  $region1: #{nano_gpt_forward.3} parent=0
    #allocation2 [shape = 'u8[8192]{0}', space=vmem, size = 0x2000, scoped, tag = 'output window, operand 0']
    #allocation3 [shape = 's32[2]{0}', space=sflag, size = 0x8, scoped, tag = 'scoped memory for nano_gpt_forward.3']
    %13 = vsyncpa [#allocation3], 0
    %s14 = scalar_lea.sflag [#allocation3], 1
    %15 = vsyncpa %s14, 0
    loop: start=0, step=1, limit=4
    $region2: #{nano_gpt_forward.3} parent=1 // loop_pre_header
      _
    $region3: #{nano_gpt_forward.3} parent=1 // loop_header
      %s17 = sphi 0, %s21
      %p18 = scmp.ge.s32.totalorder %s17, 4
      %s27 = sphi 0, %s29
      %s30 = sphi 0, %s27
      %s31 = sphi 0, %s30
      %s47 = sphi 0, %s31
      %s51 = sphi 0, %s51
      %s53 = sphi 0, %s51
      %s54 = sphi 0, %s53
      %s68 = sphi 0, %s54
      %s72 = sphi 0, %s72
      %s74 = sphi 0, %s72
      %s75 = sphi 0, %s74
      %s89 = sphi 0, %s75
      %s93 = sphi 0, %s93
      %s95 = sphi 0, %s93
      %s96 = sphi 0, %s95
      %s110 = sphi 0, %s96
      %s114 = sphi 0, %s114
      %s116 = sphi 0, %s114
      %s117 = sphi 0, %s116
      %s131 = sphi 0, %s117
      %s137 = sphi 0, %s139
      %s140 = sphi 0, %s137
      %s141 = sphi 0, %s140
      %s157 = sphi 0, %s141
      %s163 = sphi 0, %s165
      %s166 = sphi 0, %s163
      %s167 = sphi 0, %s166
      %s183 = sphi 0, %s167
      %s189 = sphi 0, %s191
      %s192 = sphi 0, %s189
      %s193 = sphi 0, %s192
      %s209 = sphi 0, %s193
    $region4: #{nano_gpt_forward.3} parent=1 // loop_header_branch
      %20 = sbr.rel (%p18) target = $region8
    $region5: #{nano_gpt_forward.3} parent=1 // loop_body
      %s22 = ssub.s32 %s17, 1
      %s23 = ssub.s32 %s17, 2
      %s24 = sadd.s32 %s17, 1
      %s25 = ssub.s32 %s17, %s24
      %p26 = scmp.eq.s32.totalorder %s25, 0
      %s28 = sadd.s32 %s27, 1
      %s29 = scalar_select %p26, %s27, %s28
      %p32 = pneg %p26
      %p33 = scmp.eq.s32.totalorder %s17, 1
      %p34 = por %p32, %p33
      %p35 = scmp.ne.s32.totalorder %s27, %s30
      %p36 = scmp.eq.s32.totalorder %s17, 0
      %p37 = por %p35, %p36
      %p38 = scmp.ne.s32.totalorder %s27, %s30
      %p39 = scmp.eq.s32.totalorder %s22, 1
      %p40 = por %p38, %p39
      %p41 = scmp.ne.s32.totalorder %s30, %s31
      %p42 = scmp.eq.s32.totalorder %s22, 0
      %p43 = por %p41, %p42
      %p44 = scmp.ne.s32.totalorder %s30, %s31
      %p45 = scmp.eq.s32.totalorder %s23, 1
      %p46 = por %p44, %p45
      %p48 = scmp.ne.s32.totalorder %s31, %s47
      %p49 = scmp.eq.s32.totalorder %s23, 0
      %p50 = por %p48, %p49
      %s52 = sadd.s32 %s51, 1
      %p55 = scmp.eq.s32.totalorder %s17, 1
      %p56 = scmp.ne.s32.totalorder %s51, %s53
      %p57 = scmp.eq.s32.totalorder %s17, 0
      %p58 = por %p56, %p57
      %p59 = scmp.ne.s32.totalorder %s51, %s53
      %p60 = scmp.eq.s32.totalorder %s22, 1
      %p61 = por %p59, %p60
      %p62 = scmp.ne.s32.totalorder %s53, %s54
      %p63 = scmp.eq.s32.totalorder %s22, 0
      %p64 = por %p62, %p63
      %p65 = scmp.ne.s32.totalorder %s53, %s54
      %p66 = scmp.eq.s32.totalorder %s23, 1
      %p67 = por %p65, %p66
      %p69 = scmp.ne.s32.totalorder %s54, %s68
      %p70 = scmp.eq.s32.totalorder %s23, 0
      %p71 = por %p69, %p70
      %s73 = sadd.s32 %s72, 1
      %p76 = scmp.eq.s32.totalorder %s17, 1
      %p77 = scmp.ne.s32.totalorder %s72, %s74
      %p78 = scmp.eq.s32.totalorder %s17, 0
      %p79 = por %p77, %p78
      %p80 = scmp.ne.s32.totalorder %s72, %s74
      %p81 = scmp.eq.s32.totalorder %s22, 1
      %p82 = por %p80, %p81
      %p83 = scmp.ne.s32.totalorder %s74, %s75
      %p84 = scmp.eq.s32.totalorder %s22, 0
      %p85 = por %p83, %p84
      %p86 = scmp.ne.s32.totalorder %s74, %s75
      %p87 = scmp.eq.s32.totalorder %s23, 1
      %p88 = por %p86, %p87
      %p90 = scmp.ne.s32.totalorder %s75, %s89
      %p91 = scmp.eq.s32.totalorder %s23, 0
      %p92 = por %p90, %p91
      %s94 = sadd.s32 %s93, 1
      %p97 = scmp.eq.s32.totalorder %s17, 1
      %p98 = scmp.ne.s32.totalorder %s93, %s95
      %p99 = scmp.eq.s32.totalorder %s17, 0
      %p100 = por %p98, %p99
      %p101 = scmp.ne.s32.totalorder %s93, %s95
      %p102 = scmp.eq.s32.totalorder %s22, 1
      %p103 = por %p101, %p102
      %p104 = scmp.ne.s32.totalorder %s95, %s96
      %p105 = scmp.eq.s32.totalorder %s22, 0
      %p106 = por %p104, %p105
      %p107 = scmp.ne.s32.totalorder %s95, %s96
      %p108 = scmp.eq.s32.totalorder %s23, 1
      %p109 = por %p107, %p108
      %p111 = scmp.ne.s32.totalorder %s96, %s110
      %p112 = scmp.eq.s32.totalorder %s23, 0
      %p113 = por %p111, %p112
      %s115 = sadd.s32 %s114, 1
      %p118 = scmp.eq.s32.totalorder %s17, 1
      %p119 = scmp.ne.s32.totalorder %s114, %s116
      %p120 = scmp.eq.s32.totalorder %s17, 0
      %p121 = por %p119, %p120
      %p122 = scmp.ne.s32.totalorder %s114, %s116
      %p123 = scmp.eq.s32.totalorder %s22, 1
      %p124 = por %p122, %p123
      %p125 = scmp.ne.s32.totalorder %s116, %s117
      %p126 = scmp.eq.s32.totalorder %s22, 0
      %p127 = por %p125, %p126
      %p128 = scmp.ne.s32.totalorder %s116, %s117
      %p129 = scmp.eq.s32.totalorder %s23, 1
      %p130 = por %p128, %p129
      %p132 = scmp.ne.s32.totalorder %s117, %s131
      %p133 = scmp.eq.s32.totalorder %s23, 0
      %p134 = por %p132, %p133
      %s135 = ssub.s32 %s17, %s24
      %p136 = scmp.eq.s32.totalorder %s135, 0
      %s138 = sadd.s32 %s137, 1
      %s139 = scalar_select %p136, %s137, %s138
      %p142 = pneg %p136
      %p143 = scmp.eq.s32.totalorder %s17, 1
      %p144 = por %p142, %p143
      %p145 = scmp.ne.s32.totalorder %s137, %s140
      %p146 = scmp.eq.s32.totalorder %s17, 0
      %p147 = por %p145, %p146
      %p148 = scmp.ne.s32.totalorder %s137, %s140
      %p149 = scmp.eq.s32.totalorder %s22, 1
      %p150 = por %p148, %p149
      %p151 = scmp.ne.s32.totalorder %s140, %s141
      %p152 = scmp.eq.s32.totalorder %s22, 0
      %p153 = por %p151, %p152
      %p154 = scmp.ne.s32.totalorder %s140, %s141
      %p155 = scmp.eq.s32.totalorder %s23, 1
      %p156 = por %p154, %p155
      %p158 = scmp.ne.s32.totalorder %s141, %s157
      %p159 = scmp.eq.s32.totalorder %s23, 0
      %p160 = por %p158, %p159
      %s161 = ssub.s32 %s17, %s24
      %p162 = scmp.eq.s32.totalorder %s161, 0
      %s164 = sadd.s32 %s163, 1
      %s165 = scalar_select %p162, %s163, %s164
      %p168 = pneg %p162
      %p169 = scmp.eq.s32.totalorder %s17, 1
      %p170 = por %p168, %p169
      %p171 = scmp.ne.s32.totalorder %s163, %s166
      %p172 = scmp.eq.s32.totalorder %s17, 0
      %p173 = por %p171, %p172
      %p174 = scmp.ne.s32.totalorder %s163, %s166
      %p175 = scmp.eq.s32.totalorder %s22, 1
      %p176 = por %p174, %p175
      %p177 = scmp.ne.s32.totalorder %s166, %s167
      %p178 = scmp.eq.s32.totalorder %s22, 0
      %p179 = por %p177, %p178
      %p180 = scmp.ne.s32.totalorder %s166, %s167
      %p181 = scmp.eq.s32.totalorder %s23, 1
      %p182 = por %p180, %p181
      %p184 = scmp.ne.s32.totalorder %s167, %s183
      %p185 = scmp.eq.s32.totalorder %s23, 0
      %p186 = por %p184, %p185
      %s187 = ssub.s32 %s17, %s24
      %p188 = scmp.eq.s32.totalorder %s187, 0
      %s190 = sadd.s32 %s189, 1
      %s191 = scalar_select %p188, %s189, %s190
      %p194 = pneg %p188
      %p195 = scmp.eq.s32.totalorder %s17, 1
      %p196 = por %p194, %p195
      %p197 = scmp.ne.s32.totalorder %s189, %s192
      %p198 = scmp.eq.s32.totalorder %s17, 0
      %p199 = por %p197, %p198
      %p200 = scmp.ne.s32.totalorder %s189, %s192
      %p201 = scmp.eq.s32.totalorder %s22, 1
      %p202 = por %p200, %p201
      %p203 = scmp.ne.s32.totalorder %s192, %s193
      %p204 = scmp.eq.s32.totalorder %s22, 0
      %p205 = por %p203, %p204
      %p206 = scmp.ne.s32.totalorder %s192, %s193
      %p207 = scmp.eq.s32.totalorder %s23, 1
      %p208 = por %p206, %p207
      %p210 = scmp.ne.s32.totalorder %s193, %s209
      %p211 = scmp.eq.s32.totalorder %s23, 0
      %p212 = por %p210, %p211
      %p213 = scmp.le.s32.totalorder 1, %s17
      %p214 = scmp.lt.s32.totalorder %s17, 3
      %p215 = pnand %p213, %p214
      %p216 = pneg %p215
      // Predicated region
      $region9: #{nano_gpt_forward.3} parent=5 // pred_check
        _
      $region10: #{nano_gpt_forward.3} parent=5 // pred_check_branch
        %218 = sbr.rel (%p215) target = $region12
      $region11: #{nano_gpt_forward.3} parent=5 // pred_region
        %s219 = ssub.s32 %s17, 1
        // Predicated region
        $region13: #{nano_gpt_forward.3} parent=11 // pred_check
          %p220 = pneg %p64
        $region14: #{nano_gpt_forward.3} parent=11 // pred_check_branch
          %222 = sbr.rel (%p220) target = $region16
        $region15: #{nano_gpt_forward.3} parent=11 // pred_region
          _
        $region16: #{nano_gpt_forward.3} parent=11 // pred_fallthru
          _
        // Predicated region
        $region17: #{nano_gpt_forward.3} parent=11 // pred_check
          %p223 = pneg %p85
        $region18: #{nano_gpt_forward.3} parent=11 // pred_check_branch
          %225 = sbr.rel (%p223) target = $region20
        $region19: #{nano_gpt_forward.3} parent=11 // pred_region
          _
        $region20: #{nano_gpt_forward.3} parent=11 // pred_fallthru
          _
        // Predicated region
        $region21: #{nano_gpt_forward.3} parent=11 // pred_check
          %p226 = pneg %p106
        $region22: #{nano_gpt_forward.3} parent=11 // pred_check_branch
          %228 = sbr.rel (%p226) target = $region24
        $region23: #{nano_gpt_forward.3} parent=11 // pred_region
          _
        $region24: #{nano_gpt_forward.3} parent=11 // pred_fallthru
          _
        // Predicated region
        $region25: #{nano_gpt_forward.3} parent=11 // pred_check
          %p229 = pneg %p127
        $region26: #{nano_gpt_forward.3} parent=11 // pred_check_branch
          %231 = sbr.rel (%p229) target = $region28
        $region27: #{nano_gpt_forward.3} parent=11 // pred_region
          _
        $region28: #{nano_gpt_forward.3} parent=11 // pred_fallthru
          _
      $region12: #{nano_gpt_forward.3} parent=5 // pred_fallthru
        _
      %p232 = scmp.lt.s32.totalorder %s17, 2
      // Predicated region
      $region29: #{nano_gpt_forward.3} parent=5 // pred_check
        %p233 = pneg %p232
      $region30: #{nano_gpt_forward.3} parent=5 // pred_check_branch
        %235 = sbr.rel (%p233) target = $region32
      $region31: #{nano_gpt_forward.3} parent=5 // pred_region
        // Predicated region
        $region33: #{nano_gpt_forward.3} parent=31 // pred_check
          %p236 = pneg %p37
        $region34: #{nano_gpt_forward.3} parent=31 // pred_check_branch
          %238 = sbr.rel (%p236) target = $region36
        $region35: #{nano_gpt_forward.3} parent=31 // pred_region
          %p239 = scmp.lt.s32.totalorder %s17, 1
          %s240 = scalar_select %p239, %s17, 1
          %s241 = smul.addr %s240, 8
          %s242 = scalar_lea.vmem %s0, %s241
        $region36: #{nano_gpt_forward.3} parent=31 // pred_fallthru
          _
        // Predicated region
        $region37: #{nano_gpt_forward.3} parent=31 // pred_check
          %p243 = pneg %p147
        $region38: #{nano_gpt_forward.3} parent=31 // pred_check_branch
          %245 = sbr.rel (%p243) target = $region40
        $region39: #{nano_gpt_forward.3} parent=31 // pred_region
          %p246 = scmp.lt.s32.totalorder %s17, 1
          %s247 = scalar_select %p246, %s17, 1
          %s248 = smul.addr %s247, 8
          %s249 = scalar_lea.vmem %s5, %s248
        $region40: #{nano_gpt_forward.3} parent=31 // pred_fallthru
          _
      $region32: #{nano_gpt_forward.3} parent=5 // pred_fallthru
        _
      %p250 = scmp.le.s32.totalorder 1, %s17
      %p251 = scmp.lt.s32.totalorder %s17, 3
      %p252 = pnand %p250, %p251
      %p253 = pneg %p252
      // Predicated region
      $region41: #{nano_gpt_forward.3} parent=5 // pred_check
        _
      $region42: #{nano_gpt_forward.3} parent=5 // pred_check_branch
        %255 = sbr.rel (%p252) target = $region44
      $region43: #{nano_gpt_forward.3} parent=5 // pred_region
        %s256 = ssub.s32 %s17, 1
        %p257 = scmp.lt.s32.totalorder %s22, 1
        %s258 = scalar_select %p257, %s22, 1
        %s259 = smul.addr %s258, 8
        %s260 = scalar_lea.vmem %s0, %s259
        %p261 = pneg %p43
        %p262 = pneg %p40
        %p263 = pneg %p64
        %p264 = pneg %p61
        %p265 = pneg %p85
        %p266 = pneg %p82
        %p267 = pneg %p106
        %p268 = pneg %p103
        %p269 = pneg %p127
        %p270 = pneg %p124
        %p271 = scmp.lt.s32.totalorder %s22, 1
        %s272 = scalar_select %p271, %s22, 1
        %s273 = smul.addr %s272, 8
        %s274 = scalar_lea.vmem %s5, %s273
        %p275 = pneg %p153
        %p276 = pneg %p150
        %p277 = pneg %p179
        %p278 = pneg %p176
        %s279 = sand.u32 %s166, 1
        %s280 = scalar_lea.sflag [#allocation3], %s279
        %s281 = sand.u32 %s166, 1
        %s282 = smul.addr %s281, 8
        %s283 = scalar_lea.vmem [#allocation2], %s282
        %p284 = pneg %p205
        %p285 = pneg %p202
        %p286 = scmp.lt.s32.totalorder %s22, 1
        %s287 = scalar_select %p286, %s22, 1
        %s288 = smul.addr %s287, 8
        %s289 = scalar_lea.vmem %s7, %s288
        %p290 = scmp.lt.s32.totalorder %s22, 1
        %s291 = scalar_select %p290, %s22, 1
        %s292 = smul.addr %s291, 8
        %s293 = scalar_lea.vmem %s0, %s292
        %p294 = scmp.lt.s32.totalorder %s22, 1
        %s295 = scalar_select %p294, %s22, 1
        %s296 = smul.addr %s295, 8
        %s297 = scalar_lea.vmem %s5, %s296
        %p298 = scmp.lt.s32.totalorder %s22, 1
        %s299 = scalar_select %p298, %s22, 1
        %s300 = smul.addr %s299, 8
        %s301 = scalar_lea.vmem %s7, %s300
        %v303 = vld [vmem:[%s293] sm:$0xff]
        %v304 = vld [vmem:[%s1] sm:$0x1]
        %v305 = vld [vmem:[%s2] sm:$0x1]
        %vm306 = vcmask 261120
        %v307 = vsel %vm306, %v303, 0.0
        %308 = vadd.xlane.f32.xlu0 %v307
        %v309 = vpop.xlane.xlu0 %308
        %v310 = vrcp.pop 32.0
        %v311 = vmul.f32 %v309, %v310
        %v312 = vsub.f32 %v303, %v311
        %v313 = vmul.f32 %v312, %v312
        %v314 = vsel %vm306, %v313, 0.0
        %315 = vadd.xlane.f32.xlu0 %v314
        %v316 = vpop.xlane.xlu0 %315
        %v317 = vmul.f32 %v316, %v310
        %v318 = vadd.f32 %v317, 1e-05
        %v319 = vrsqrt.pop %v318
        %v320 = vmul.f32 %v312, %v319
        %v322 = vlaneseq
        %v323 = vshrl.u32 %v322, 7
        %v324 = vsub.s32 0, %v323
        %v325 = vrot.slane %v304, %v324
        %v327 = vmul.f32 %v320, %v325
        %v329 = vlaneseq
        %v330 = vshrl.u32 %v329, 7
        %v331 = vsub.s32 0, %v330
        %v332 = vrot.slane %v305, %v331
        %v334 = vadd.f32 %v327, %v332
        %v335 = vpack.c.bf16 %v334, %v334
        %v336 = vld [vmem:[%s3] sm:$0xf]
        %v337 = vld [vmem:[%s3 + $0x4] sm:$0xf]
        %v338 = vld [vmem:[%s3 + $0x8] sm:$0xf]
        %v339 = vld [vmem:[%s3 + $0xc] sm:$0xf]
        %v340 = vld [vmem:[%s4] sm:$0x1]
        %v342 = vlaneseq
        %v343 = vshrl.u32 %v342, 7
        %v344 = vsub.s32 0, %v343
        %v345 = vrot.slane %v340, %v344
        %v351 = vunpack.c.l.b16 %v336
        %v352 = vunpack.c.l.b16 %v337
        %v353 = vunpack.c.l.b16 %v338
        %v354 = vunpack.c.l.b16 %v339
        %v355 = vpack.c.b16 %v352, %v351
        %v356 = vpack.c.b16 %v354, %v353
        %v360 = vsel %vm306, %v335, 0
        %362 = vmatprep.subr.bf16.mxu0 0
        %363 = vmatpush1.bf16.msra.mxu0 0
        %364 = vmatprep.subr.bf16.mxu0 0
        %365 = vmatpush1.bf16.msra.mxu0 0
        %366 = vmatprep.subr.bf16.mxu0 0
        %367 = vmatpush1.bf16.msra.mxu0 0
        %368 = vmatprep.subr.bf16.mxu0 0
        %369 = vmatpush1.bf16.msra.mxu0 0
        %370 = vmatprep.subr.bf16.mxu0 0
        %371 = vmatpush1.bf16.msra.mxu0 0
        %372 = vmatprep.subr.bf16.mxu0 0
        %373 = vmatpush1.bf16.msra.mxu0 0
        %374 = vmatprep.subr.bf16.mxu0 0
        %375 = vmatpush1.bf16.msra.mxu0 %v356
        %376 = vmatprep.subr.bf16.mxu0 0
        %377 = vmatpush1.bf16.msra.mxu0 %v355
        %378 = vmatprep.subr.bf16.mxu0 0
        %379 = vmatpush2.bf16.msra.mxu0 0
        %380 = vmatprep.subr.bf16.mxu0 0
        %381 = vmatpush2.bf16.msra.mxu0 0
        %382 = vmatprep.subr.bf16.mxu0 0
        %383 = vmatpush2.bf16.msra.mxu0 0
        %384 = vmatprep.subr.bf16.mxu0 0
        %385 = vmatpush2.bf16.msra.mxu0 0
        %386 = vmatprep.subr.bf16.mxu0 0
        %387 = vmatpush2.bf16.msra.mxu0 0
        %388 = vmatprep.subr.bf16.mxu0 0
        %389 = vmatpush2.bf16.msra.mxu0 0
        %390 = vmatprep.subr.bf16.mxu0 0
        %391 = vmatpush2.bf16.msra.mxu0 0
        %392 = vmatprep.subr.bf16.mxu0 0
        %393 = vmatpush2.bf16.msra.mxu0 0
        %394 = vmatprep.mubr.bf16.mxu0 0
        %395 = vmatmul.mubr.bf16.gmra.mxu0 %v360
        %v396 = vpop.f32.mrf.mxu0
        %v397 = vadd.f32 %v345, %v396
        %v398 = vpop.f32.mrf.mxu0
        %v399 = vpop.f32.mrf.mxu0
        %v400 = vpop.f32.mrf.mxu0
        %401 = vdwg.mxu0
        %402 = vst [vmem:[%s283] sm:$0xff] %v397
        %403 = vmax.xlane.f32.xlu0 %v397
        %v404 = vpop.xlane.xlu0 %403
        %v405 = vsub.f32 %v397, %v404
        %v406 = vmul.f32 %v405, 1.442695
        %v407 = vpow.pop %v406
        %408 = vadd.xlane.f32.xlu0 %v407
        %v409 = vpop.xlane.xlu0 %408
        %v410 = vlog2.pop %v409
        %v411 = vmul.f32 %v410, 0.6931472
        %v412 = vadd.f32 %v404, %v411
        %v413 = vld [vmem:[%s297] sm:$0xff]
        %v414 = vlaneseq
        %v415 = vand.u32 %v414, 127
        %416 = vset.pattern.permute.xlu0 0
        %417 = vperm.xlu0 %416, %v413
        %v418 = vpop.permute.xlu0 %417
        %vm419 = vcmp.eq.s32.totalorder %v415, %v418
        %v420 = vsel %vm419, %v397, 0.0
        %421 = vadd.xlane.f32.xlu0 %v420
        %v422 = vpop.xlane.xlu0 %421
        %v423 = vsub.f32 %v412, %v422
        %vm424 = vcmask 7168
        %425 = vst.msk [vmem:[%s301] sm:$0xff] %vm424, %v423
        %s426 = sand.u32 %s166, 1
        %s427 = scalar_lea.sflag [#allocation3], %s426
        %s428 = sand.u32 %s166, 1
        %s429 = smul.addr %s428, 8
        %s430 = scalar_lea.vmem [#allocation2], %s429
        %p431 = scmp.lt.s32.totalorder %s22, 1
        %s432 = scalar_select %p431, %s22, 1
        %s433 = smul.addr %s432, 8
        %s434 = scalar_lea.vmem %s7, %s433
        // Predicated region
        $region45: #{nano_gpt_forward.3} parent=43 // pred_check
          %p435 = pneg %p176
        $region46: #{nano_gpt_forward.3} parent=43 // pred_check_branch
          %437 = sbr.rel (%p435) target = $region48
        $region47: #{nano_gpt_forward.3} parent=43 // pred_region
          %s439 = ssub.s32 128, 128
          %440 = vsyncadd %s427, %s439
          %s441 = smul.addr %s22, 128
          %s442 = scalar_lea.hbm %s6, %s441
          %s444 = sshll.u32 %s430, 4
          %s445 = int_to_ptr.vmem [resolvable:$true] %s444
          %447 = dma.vmem_to_hbm [thread:$0]  %s445, 128, %s442, %s427
        $region48: #{nano_gpt_forward.3} parent=43 // pred_fallthru
          _
        // Predicated region
        $region49: #{nano_gpt_forward.3} parent=43 // pred_check
          %p448 = pneg %p202
        $region50: #{nano_gpt_forward.3} parent=43 // pred_check_branch
          %450 = sbr.rel (%p448) target = $region52
        $region51: #{nano_gpt_forward.3} parent=43 // pred_region
          _
        $region52: #{nano_gpt_forward.3} parent=43 // pred_fallthru
          _
      $region44: #{nano_gpt_forward.3} parent=5 // pred_fallthru
        _
      %p451 = scmp.le.s32.totalorder 2, %s17
      // Predicated region
      $region53: #{nano_gpt_forward.3} parent=5 // pred_check
        %p452 = pneg %p451
      $region54: #{nano_gpt_forward.3} parent=5 // pred_check_branch
        %454 = sbr.rel (%p452) target = $region56
      $region55: #{nano_gpt_forward.3} parent=5 // pred_region
        %s455 = ssub.s32 %s17, 2
        // Predicated region
        $region57: #{nano_gpt_forward.3} parent=55 // pred_check
          %p456 = pneg %p182
        $region58: #{nano_gpt_forward.3} parent=55 // pred_check_branch
          %458 = sbr.rel (%p456) target = $region60
        $region59: #{nano_gpt_forward.3} parent=55 // pred_region
          %s459 = sand.u32 %s167, 1
          %s460 = scalar_lea.sflag [#allocation3], %s459
          %s461 = sand.u32 %s167, 1
          %s462 = smul.addr %s461, 8
          %s463 = scalar_lea.vmem [#allocation2], %s462
          %464 = dma.done %s460, 128
        $region60: #{nano_gpt_forward.3} parent=55 // pred_fallthru
          _
        // Predicated region
        $region61: #{nano_gpt_forward.3} parent=55 // pred_check
          %p465 = pneg %p208
        $region62: #{nano_gpt_forward.3} parent=55 // pred_check_branch
          %467 = sbr.rel (%p465) target = $region64
        $region63: #{nano_gpt_forward.3} parent=55 // pred_region
          %p468 = scmp.lt.s32.totalorder %s23, 1
          %s469 = scalar_select %p468, %s23, 1
          %s470 = smul.addr %s469, 8
          %s471 = scalar_lea.vmem %s7, %s470
        $region64: #{nano_gpt_forward.3} parent=55 // pred_fallthru
          _
      $region56: #{nano_gpt_forward.3} parent=5 // pred_fallthru
        _
    $region6: #{nano_gpt_forward.3} parent=1 // loop_footer
      %s21 = sadd.s32 1, %s17
    $region7: #{nano_gpt_forward.3} parent=1 // loop_footer_branch
      %16 = sbr.rel target = $region3
    $region8: #{nano_gpt_forward.3} parent=1 // loop_exit
      _
    %472 = vsyncpa [#allocation3], 1
    %s473 = scalar_lea.sflag [#allocation3], 1
    %474 = vsyncpa %s473, 1

// kernel: nano_gpt_forward.2
$region0: #{nano_gpt_forward.2}
  #allocation0 [shape = 'u32[]', space=smem, size = 0x4, offset = 0x4, fixed_abs, tag = 'smem constant byte address 0x4 - core index']
  #allocation1 [shape = 'u32[144,128]{1,0:T(1,128)}', space=vmem, size = 0x12000, scoped, tag = 'internal scratch']
  %s0 = inlined_call_operand.vmem [shape: f32[2,8,32], index: 0, kind: input, shape index: {}]
  %s1 = inlined_call_operand.vmem [shape: f32[2,1,32], index: 1, kind: input, shape index: {}]
  %s2 = inlined_call_operand.vmem [shape: f32[2,1,32], index: 2, kind: input, shape index: {}]
  %s3 = inlined_call_operand.vmem [shape: bf16[2,32,96], index: 3, kind: input, shape index: {}]
  %s4 = inlined_call_operand.vmem [shape: bf16[2,32,32], index: 4, kind: input, shape index: {}]
  %s5 = inlined_call_operand.vmem [shape: f32[2,1,32], index: 5, kind: input, shape index: {}]
  %s6 = inlined_call_operand.vmem [shape: f32[2,1,32], index: 6, kind: input, shape index: {}]
  %s7 = inlined_call_operand.vmem [shape: f32[2,1,32], index: 7, kind: input, shape index: {}]
  %s8 = inlined_call_operand.vmem [shape: bf16[2,32,128], index: 8, kind: input, shape index: {}]
  %s9 = inlined_call_operand.vmem [shape: f32[2,1,128], index: 9, kind: input, shape index: {}]
  %s10 = inlined_call_operand.vmem [shape: bf16[2,128,32], index: 10, kind: input, shape index: {}]
  %s11 = inlined_call_operand.vmem [shape: f32[2,1,32], index: 11, kind: input, shape index: {}]
  %s12 = inlined_call_operand.vmem [shape: f32[2,8,32], index: 12, kind: output, shape index: {}]
  %s13 = sld [smem:[#allocation0]]
  $region85: #{nano_gpt_forward.2} parent=0
    _
  %s15 = ssub.s32 1, %s13
  %s16 = scalar_select 0, %s15, %s13
  loop: start=0, step=1, limit=6
  $region2: #{nano_gpt_forward.2} parent=0 // loop_pre_header
    _
  $region3: #{nano_gpt_forward.2} parent=0 // loop_header
    %s18 = sphi 0, %s22
    %p19 = scmp.ge.s32.totalorder %s18, 6
    %s25 = sphi 0, %s37
    %s26 = sphi 0, %s33
    %s27 = sphi 0, %s25
    %s28 = sphi 0, %s26
    %s29 = sphi 0, %s27
    %s30 = sphi 0, %s28
    %s40 = sphi 0, %s42
    %s43 = sphi 0, %s40
    %s44 = sphi 0, %s43
    %s60 = sphi 0, %s44
    %s66 = sphi 0, %s68
    %s69 = sphi 0, %s66
    %s70 = sphi 0, %s69
    %s86 = sphi 0, %s70
    %s92 = sphi 0, %s94
    %s95 = sphi 0, %s92
    %s96 = sphi 0, %s95
    %s112 = sphi 0, %s96
    %s118 = sphi 0, %s120
    %s121 = sphi 0, %s118
    %s122 = sphi 0, %s121
    %s138 = sphi 0, %s122
    %s144 = sphi 0, %s146
    %s147 = sphi 0, %s144
    %s148 = sphi 0, %s147
    %s164 = sphi 0, %s148
    %s170 = sphi 0, %s172
    %s173 = sphi 0, %s170
    %s174 = sphi 0, %s173
    %s190 = sphi 0, %s174
    %s196 = sphi 0, %s198
    %s199 = sphi 0, %s196
    %s200 = sphi 0, %s199
    %s216 = sphi 0, %s200
    %s222 = sphi 0, %s224
    %s225 = sphi 0, %s222
    %s226 = sphi 0, %s225
    %s242 = sphi 0, %s226
    %s248 = sphi 0, %s250
    %s251 = sphi 0, %s248
    %s252 = sphi 0, %s251
    %s268 = sphi 0, %s252
    %s274 = sphi 0, %s276
    %s277 = sphi 0, %s274
    %s278 = sphi 0, %s277
    %s294 = sphi 0, %s278
    %s300 = sphi 0, %s302
    %s303 = sphi 0, %s300
    %s304 = sphi 0, %s303
    %s320 = sphi 0, %s304
    %s326 = sphi 0, %s328
    %s329 = sphi 0, %s326
    %s330 = sphi 0, %s329
    %s346 = sphi 0, %s330
    %s352 = sphi 0, %s354
    %s355 = sphi 0, %s352
    %s356 = sphi 0, %s355
    %s372 = sphi 0, %s356
  $region4: #{nano_gpt_forward.2} parent=0 // loop_header_branch
    %21 = sbr.rel (%p19) target = $region8
  $region5: #{nano_gpt_forward.2} parent=0 // loop_body
    %s23 = ssub.s32 %s18, 1
    %s24 = ssub.s32 %s18, 2
    %s31 = sadd.s32 1, %s26
    %p32 = scmp.ge.s32.totalorder %s31, 2
    %s33 = scalar_select %p32, 0, %s31
    %s34 = sadd.s32 1, %s25
    %s35 = scalar_select %p32, %s34, %s25
    %p36 = scmp.ge.s32.totalorder %s35, 2
    %s37 = scalar_select %p36, 0, %s35
    %s38 = ssub.s32 %s25, %s37
    %p39 = scmp.eq.s32.totalorder %s38, 0
    %s41 = sadd.s32 %s40, 1
    %s42 = scalar_select %p39, %s40, %s41
    %p45 = pneg %p39
    %p46 = scmp.eq.s32.totalorder %s18, 3
    %p47 = por %p45, %p46
    %p48 = scmp.ne.s32.totalorder %s40, %s43
    %p49 = scmp.eq.s32.totalorder %s18, 0
    %p50 = por %p48, %p49
    %p51 = scmp.ne.s32.totalorder %s40, %s43
    %p52 = scmp.eq.s32.totalorder %s23, 3
    %p53 = por %p51, %p52
    %p54 = scmp.ne.s32.totalorder %s43, %s44
    %p55 = scmp.eq.s32.totalorder %s23, 0
    %p56 = por %p54, %p55
    %p57 = scmp.ne.s32.totalorder %s43, %s44
    %p58 = scmp.eq.s32.totalorder %s24, 3
    %p59 = por %p57, %p58
    %p61 = scmp.ne.s32.totalorder %s44, %s60
    %p62 = scmp.eq.s32.totalorder %s24, 0
    %p63 = por %p61, %p62
    %s64 = ssub.s32 %s26, %s33
    %p65 = scmp.eq.s32.totalorder %s64, 0
    %s67 = sadd.s32 %s66, 1
    %s68 = scalar_select %p65, %s66, %s67
    %p71 = pneg %p65
    %p72 = scmp.eq.s32.totalorder %s18, 3
    %p73 = por %p71, %p72
    %p74 = scmp.ne.s32.totalorder %s66, %s69
    %p75 = scmp.eq.s32.totalorder %s18, 0
    %p76 = por %p74, %p75
    %p77 = scmp.ne.s32.totalorder %s66, %s69
    %p78 = scmp.eq.s32.totalorder %s23, 3
    %p79 = por %p77, %p78
    %p80 = scmp.ne.s32.totalorder %s69, %s70
    %p81 = scmp.eq.s32.totalorder %s23, 0
    %p82 = por %p80, %p81
    %p83 = scmp.ne.s32.totalorder %s69, %s70
    %p84 = scmp.eq.s32.totalorder %s24, 3
    %p85 = por %p83, %p84
    %p87 = scmp.ne.s32.totalorder %s70, %s86
    %p88 = scmp.eq.s32.totalorder %s24, 0
    %p89 = por %p87, %p88
    %s90 = ssub.s32 %s26, %s33
    %p91 = scmp.eq.s32.totalorder %s90, 0
    %s93 = sadd.s32 %s92, 1
    %s94 = scalar_select %p91, %s92, %s93
    %p97 = pneg %p91
    %p98 = scmp.eq.s32.totalorder %s18, 3
    %p99 = por %p97, %p98
    %p100 = scmp.ne.s32.totalorder %s92, %s95
    %p101 = scmp.eq.s32.totalorder %s18, 0
    %p102 = por %p100, %p101
    %p103 = scmp.ne.s32.totalorder %s92, %s95
    %p104 = scmp.eq.s32.totalorder %s23, 3
    %p105 = por %p103, %p104
    %p106 = scmp.ne.s32.totalorder %s95, %s96
    %p107 = scmp.eq.s32.totalorder %s23, 0
    %p108 = por %p106, %p107
    %p109 = scmp.ne.s32.totalorder %s95, %s96
    %p110 = scmp.eq.s32.totalorder %s24, 3
    %p111 = por %p109, %p110
    %p113 = scmp.ne.s32.totalorder %s96, %s112
    %p114 = scmp.eq.s32.totalorder %s24, 0
    %p115 = por %p113, %p114
    %s116 = ssub.s32 %s26, %s33
    %p117 = scmp.eq.s32.totalorder %s116, 0
    %s119 = sadd.s32 %s118, 1
    %s120 = scalar_select %p117, %s118, %s119
    %p123 = pneg %p117
    %p124 = scmp.eq.s32.totalorder %s18, 3
    %p125 = por %p123, %p124
    %p126 = scmp.ne.s32.totalorder %s118, %s121
    %p127 = scmp.eq.s32.totalorder %s18, 0
    %p128 = por %p126, %p127
    %p129 = scmp.ne.s32.totalorder %s118, %s121
    %p130 = scmp.eq.s32.totalorder %s23, 3
    %p131 = por %p129, %p130
    %p132 = scmp.ne.s32.totalorder %s121, %s122
    %p133 = scmp.eq.s32.totalorder %s23, 0
    %p134 = por %p132, %p133
    %p135 = scmp.ne.s32.totalorder %s121, %s122
    %p136 = scmp.eq.s32.totalorder %s24, 3
    %p137 = por %p135, %p136
    %p139 = scmp.ne.s32.totalorder %s122, %s138
    %p140 = scmp.eq.s32.totalorder %s24, 0
    %p141 = por %p139, %p140
    %s142 = ssub.s32 %s26, %s33
    %p143 = scmp.eq.s32.totalorder %s142, 0
    %s145 = sadd.s32 %s144, 1
    %s146 = scalar_select %p143, %s144, %s145
    %p149 = pneg %p143
    %p150 = scmp.eq.s32.totalorder %s18, 3
    %p151 = por %p149, %p150
    %p152 = scmp.ne.s32.totalorder %s144, %s147
    %p153 = scmp.eq.s32.totalorder %s18, 0
    %p154 = por %p152, %p153
    %p155 = scmp.ne.s32.totalorder %s144, %s147
    %p156 = scmp.eq.s32.totalorder %s23, 3
    %p157 = por %p155, %p156
    %p158 = scmp.ne.s32.totalorder %s147, %s148
    %p159 = scmp.eq.s32.totalorder %s23, 0
    %p160 = por %p158, %p159
    %p161 = scmp.ne.s32.totalorder %s147, %s148
    %p162 = scmp.eq.s32.totalorder %s24, 3
    %p163 = por %p161, %p162
    %p165 = scmp.ne.s32.totalorder %s148, %s164
    %p166 = scmp.eq.s32.totalorder %s24, 0
    %p167 = por %p165, %p166
    %s168 = ssub.s32 %s26, %s33
    %p169 = scmp.eq.s32.totalorder %s168, 0
    %s171 = sadd.s32 %s170, 1
    %s172 = scalar_select %p169, %s170, %s171
    %p175 = pneg %p169
    %p176 = scmp.eq.s32.totalorder %s18, 3
    %p177 = por %p175, %p176
    %p178 = scmp.ne.s32.totalorder %s170, %s173
    %p179 = scmp.eq.s32.totalorder %s18, 0
    %p180 = por %p178, %p179
    %p181 = scmp.ne.s32.totalorder %s170, %s173
    %p182 = scmp.eq.s32.totalorder %s23, 3
    %p183 = por %p181, %p182
    %p184 = scmp.ne.s32.totalorder %s173, %s174
    %p185 = scmp.eq.s32.totalorder %s23, 0
    %p186 = por %p184, %p185
    %p187 = scmp.ne.s32.totalorder %s173, %s174
    %p188 = scmp.eq.s32.totalorder %s24, 3
    %p189 = por %p187, %p188
    %p191 = scmp.ne.s32.totalorder %s174, %s190
    %p192 = scmp.eq.s32.totalorder %s24, 0
    %p193 = por %p191, %p192
    %s194 = ssub.s32 %s26, %s33
    %p195 = scmp.eq.s32.totalorder %s194, 0
    %s197 = sadd.s32 %s196, 1
    %s198 = scalar_select %p195, %s196, %s197
    %p201 = pneg %p195
    %p202 = scmp.eq.s32.totalorder %s18, 3
    %p203 = por %p201, %p202
    %p204 = scmp.ne.s32.totalorder %s196, %s199
    %p205 = scmp.eq.s32.totalorder %s18, 0
    %p206 = por %p204, %p205
    %p207 = scmp.ne.s32.totalorder %s196, %s199
    %p208 = scmp.eq.s32.totalorder %s23, 3
    %p209 = por %p207, %p208
    %p210 = scmp.ne.s32.totalorder %s199, %s200
    %p211 = scmp.eq.s32.totalorder %s23, 0
    %p212 = por %p210, %p211
    %p213 = scmp.ne.s32.totalorder %s199, %s200
    %p214 = scmp.eq.s32.totalorder %s24, 3
    %p215 = por %p213, %p214
    %p217 = scmp.ne.s32.totalorder %s200, %s216
    %p218 = scmp.eq.s32.totalorder %s24, 0
    %p219 = por %p217, %p218
    %s220 = ssub.s32 %s26, %s33
    %p221 = scmp.eq.s32.totalorder %s220, 0
    %s223 = sadd.s32 %s222, 1
    %s224 = scalar_select %p221, %s222, %s223
    %p227 = pneg %p221
    %p228 = scmp.eq.s32.totalorder %s18, 3
    %p229 = por %p227, %p228
    %p230 = scmp.ne.s32.totalorder %s222, %s225
    %p231 = scmp.eq.s32.totalorder %s18, 0
    %p232 = por %p230, %p231
    %p233 = scmp.ne.s32.totalorder %s222, %s225
    %p234 = scmp.eq.s32.totalorder %s23, 3
    %p235 = por %p233, %p234
    %p236 = scmp.ne.s32.totalorder %s225, %s226
    %p237 = scmp.eq.s32.totalorder %s23, 0
    %p238 = por %p236, %p237
    %p239 = scmp.ne.s32.totalorder %s225, %s226
    %p240 = scmp.eq.s32.totalorder %s24, 3
    %p241 = por %p239, %p240
    %p243 = scmp.ne.s32.totalorder %s226, %s242
    %p244 = scmp.eq.s32.totalorder %s24, 0
    %p245 = por %p243, %p244
    %s246 = ssub.s32 %s26, %s33
    %p247 = scmp.eq.s32.totalorder %s246, 0
    %s249 = sadd.s32 %s248, 1
    %s250 = scalar_select %p247, %s248, %s249
    %p253 = pneg %p247
    %p254 = scmp.eq.s32.totalorder %s18, 3
    %p255 = por %p253, %p254
    %p256 = scmp.ne.s32.totalorder %s248, %s251
    %p257 = scmp.eq.s32.totalorder %s18, 0
    %p258 = por %p256, %p257
    %p259 = scmp.ne.s32.totalorder %s248, %s251
    %p260 = scmp.eq.s32.totalorder %s23, 3
    %p261 = por %p259, %p260
    %p262 = scmp.ne.s32.totalorder %s251, %s252
    %p263 = scmp.eq.s32.totalorder %s23, 0
    %p264 = por %p262, %p263
    %p265 = scmp.ne.s32.totalorder %s251, %s252
    %p266 = scmp.eq.s32.totalorder %s24, 3
    %p267 = por %p265, %p266
    %p269 = scmp.ne.s32.totalorder %s252, %s268
    %p270 = scmp.eq.s32.totalorder %s24, 0
    %p271 = por %p269, %p270
    %s272 = ssub.s32 %s26, %s33
    %p273 = scmp.eq.s32.totalorder %s272, 0
    %s275 = sadd.s32 %s274, 1
    %s276 = scalar_select %p273, %s274, %s275
    %p279 = pneg %p273
    %p280 = scmp.eq.s32.totalorder %s18, 3
    %p281 = por %p279, %p280
    %p282 = scmp.ne.s32.totalorder %s274, %s277
    %p283 = scmp.eq.s32.totalorder %s18, 0
    %p284 = por %p282, %p283
    %p285 = scmp.ne.s32.totalorder %s274, %s277
    %p286 = scmp.eq.s32.totalorder %s23, 3
    %p287 = por %p285, %p286
    %p288 = scmp.ne.s32.totalorder %s277, %s278
    %p289 = scmp.eq.s32.totalorder %s23, 0
    %p290 = por %p288, %p289
    %p291 = scmp.ne.s32.totalorder %s277, %s278
    %p292 = scmp.eq.s32.totalorder %s24, 3
    %p293 = por %p291, %p292
    %p295 = scmp.ne.s32.totalorder %s278, %s294
    %p296 = scmp.eq.s32.totalorder %s24, 0
    %p297 = por %p295, %p296
    %s298 = ssub.s32 %s26, %s33
    %p299 = scmp.eq.s32.totalorder %s298, 0
    %s301 = sadd.s32 %s300, 1
    %s302 = scalar_select %p299, %s300, %s301
    %p305 = pneg %p299
    %p306 = scmp.eq.s32.totalorder %s18, 3
    %p307 = por %p305, %p306
    %p308 = scmp.ne.s32.totalorder %s300, %s303
    %p309 = scmp.eq.s32.totalorder %s18, 0
    %p310 = por %p308, %p309
    %p311 = scmp.ne.s32.totalorder %s300, %s303
    %p312 = scmp.eq.s32.totalorder %s23, 3
    %p313 = por %p311, %p312
    %p314 = scmp.ne.s32.totalorder %s303, %s304
    %p315 = scmp.eq.s32.totalorder %s23, 0
    %p316 = por %p314, %p315
    %p317 = scmp.ne.s32.totalorder %s303, %s304
    %p318 = scmp.eq.s32.totalorder %s24, 3
    %p319 = por %p317, %p318
    %p321 = scmp.ne.s32.totalorder %s304, %s320
    %p322 = scmp.eq.s32.totalorder %s24, 0
    %p323 = por %p321, %p322
    %s324 = ssub.s32 %s26, %s33
    %p325 = scmp.eq.s32.totalorder %s324, 0
    %s327 = sadd.s32 %s326, 1
    %s328 = scalar_select %p325, %s326, %s327
    %p331 = pneg %p325
    %p332 = scmp.eq.s32.totalorder %s18, 3
    %p333 = por %p331, %p332
    %p334 = scmp.ne.s32.totalorder %s326, %s329
    %p335 = scmp.eq.s32.totalorder %s18, 0
    %p336 = por %p334, %p335
    %p337 = scmp.ne.s32.totalorder %s326, %s329
    %p338 = scmp.eq.s32.totalorder %s23, 3
    %p339 = por %p337, %p338
    %p340 = scmp.ne.s32.totalorder %s329, %s330
    %p341 = scmp.eq.s32.totalorder %s23, 0
    %p342 = por %p340, %p341
    %p343 = scmp.ne.s32.totalorder %s329, %s330
    %p344 = scmp.eq.s32.totalorder %s24, 3
    %p345 = por %p343, %p344
    %p347 = scmp.ne.s32.totalorder %s330, %s346
    %p348 = scmp.eq.s32.totalorder %s24, 0
    %p349 = por %p347, %p348
    %s350 = ssub.s32 %s25, %s37
    %p351 = scmp.eq.s32.totalorder %s350, 0
    %s353 = sadd.s32 %s352, 1
    %s354 = scalar_select %p351, %s352, %s353
    %p357 = pneg %p351
    %p358 = scmp.eq.s32.totalorder %s18, 3
    %p359 = por %p357, %p358
    %p360 = scmp.ne.s32.totalorder %s352, %s355
    %p361 = scmp.eq.s32.totalorder %s18, 0
    %p362 = por %p360, %p361
    %p363 = scmp.ne.s32.totalorder %s352, %s355
    %p364 = scmp.eq.s32.totalorder %s23, 3
    %p365 = por %p363, %p364
    %p366 = scmp.ne.s32.totalorder %s355, %s356
    %p367 = scmp.eq.s32.totalorder %s23, 0
    %p368 = por %p366, %p367
    %p369 = scmp.ne.s32.totalorder %s355, %s356
    %p370 = scmp.eq.s32.totalorder %s24, 3
    %p371 = por %p369, %p370
    %p373 = scmp.ne.s32.totalorder %s356, %s372
    %p374 = scmp.eq.s32.totalorder %s24, 0
    %p375 = por %p373, %p374
    %p376 = scmp.le.s32.totalorder 1, %s18
    %p377 = scmp.lt.s32.totalorder %s18, 5
    %p378 = pnand %p376, %p377
    %p379 = pneg %p378
    // Predicated region
    $region9: #{nano_gpt_forward.2} parent=5 // pred_check
      _
    $region10: #{nano_gpt_forward.2} parent=5 // pred_check_branch
      %381 = sbr.rel (%p378) target = $region12
    $region11: #{nano_gpt_forward.2} parent=5 // pred_region
      %s382 = ssub.s32 %s18, 1
    $region12: #{nano_gpt_forward.2} parent=5 // pred_fallthru
      _
    %p383 = scmp.lt.s32.totalorder %s18, 4
    // Predicated region
    $region13: #{nano_gpt_forward.2} parent=5 // pred_check
      %p384 = pneg %p383
    $region14: #{nano_gpt_forward.2} parent=5 // pred_check_branch
      %386 = sbr.rel (%p384) target = $region16
    $region15: #{nano_gpt_forward.2} parent=5 // pred_region
      // Predicated region
      $region17: #{nano_gpt_forward.2} parent=15 // pred_check
        %p387 = pneg %p50
      $region18: #{nano_gpt_forward.2} parent=15 // pred_check_branch
        %389 = sbr.rel (%p387) target = $region20
      $region19: #{nano_gpt_forward.2} parent=15 // pred_region
        %p390 = scmp.lt.s32.totalorder %s25, 1
        %s391 = scalar_select %p390, %s25, 1
        %s392 = smul.addr %s391, 8
        %s393 = scalar_lea.vmem %s0, %s392
      $region20: #{nano_gpt_forward.2} parent=15 // pred_fallthru
        _
      // Predicated region
      $region21: #{nano_gpt_forward.2} parent=15 // pred_check
        %p394 = pneg %p76
      $region22: #{nano_gpt_forward.2} parent=15 // pred_check_branch
        %396 = sbr.rel (%p394) target = $region24
      $region23: #{nano_gpt_forward.2} parent=15 // pred_region
        %p397 = scmp.lt.s32.totalorder %s26, 1
        %s398 = scalar_select %p397, %s26, 1
        %s399 = scalar_lea.vmem %s1, %s398
      $region24: #{nano_gpt_forward.2} parent=15 // pred_fallthru
        _
      // Predicated region
      $region25: #{nano_gpt_forward.2} parent=15 // pred_check
        %p400 = pneg %p102
      $region26: #{nano_gpt_forward.2} parent=15 // pred_check_branch
        %402 = sbr.rel (%p400) target = $region28
      $region27: #{nano_gpt_forward.2} parent=15 // pred_region
        %p403 = scmp.lt.s32.totalorder %s26, 1
        %s404 = scalar_select %p403, %s26, 1
        %s405 = scalar_lea.vmem %s2, %s404
      $region28: #{nano_gpt_forward.2} parent=15 // pred_fallthru
        _
      // Predicated region
      $region29: #{nano_gpt_forward.2} parent=15 // pred_check
        %p406 = pneg %p128
      $region30: #{nano_gpt_forward.2} parent=15 // pred_check_branch
        %408 = sbr.rel (%p406) target = $region32
      $region31: #{nano_gpt_forward.2} parent=15 // pred_region
        %p409 = scmp.lt.s32.totalorder %s26, 1
        %s410 = scalar_select %p409, %s26, 1
        %s411 = smul.addr %s410, 4
        %s412 = smul.addr %s411, 4
        %s413 = scalar_lea.vmem %s3, %s412
      $region32: #{nano_gpt_forward.2} parent=15 // pred_fallthru
        _
      // Predicated region
      $region33: #{nano_gpt_forward.2} parent=15 // pred_check
        %p414 = pneg %p154
      $region34: #{nano_gpt_forward.2} parent=15 // pred_check_branch
        %416 = sbr.rel (%p414) target = $region36
      $region35: #{nano_gpt_forward.2} parent=15 // pred_region
        %p417 = scmp.lt.s32.totalorder %s26, 1
        %s418 = scalar_select %p417, %s26, 1
        %s419 = smul.addr %s418, 4
        %s420 = smul.addr %s419, 4
        %s421 = scalar_lea.vmem %s4, %s420
      $region36: #{nano_gpt_forward.2} parent=15 // pred_fallthru
        _
      // Predicated region
      $region37: #{nano_gpt_forward.2} parent=15 // pred_check
        %p422 = pneg %p180
      $region38: #{nano_gpt_forward.2} parent=15 // pred_check_branch
        %424 = sbr.rel (%p422) target = $region40
      $region39: #{nano_gpt_forward.2} parent=15 // pred_region
        %p425 = scmp.lt.s32.totalorder %s26, 1
        %s426 = scalar_select %p425, %s26, 1
        %s427 = scalar_lea.vmem %s5, %s426
      $region40: #{nano_gpt_forward.2} parent=15 // pred_fallthru
        _
      // Predicated region
      $region41: #{nano_gpt_forward.2} parent=15 // pred_check
        %p428 = pneg %p206
      $region42: #{nano_gpt_forward.2} parent=15 // pred_check_branch
        %430 = sbr.rel (%p428) target = $region44
      $region43: #{nano_gpt_forward.2} parent=15 // pred_region
        %p431 = scmp.lt.s32.totalorder %s26, 1
        %s432 = scalar_select %p431, %s26, 1
        %s433 = scalar_lea.vmem %s6, %s432
      $region44: #{nano_gpt_forward.2} parent=15 // pred_fallthru
        _
      // Predicated region
      $region45: #{nano_gpt_forward.2} parent=15 // pred_check
        %p434 = pneg %p232
      $region46: #{nano_gpt_forward.2} parent=15 // pred_check_branch
        %436 = sbr.rel (%p434) target = $region48
      $region47: #{nano_gpt_forward.2} parent=15 // pred_region
        %p437 = scmp.lt.s32.totalorder %s26, 1
        %s438 = scalar_select %p437, %s26, 1
        %s439 = scalar_lea.vmem %s7, %s438
      $region48: #{nano_gpt_forward.2} parent=15 // pred_fallthru
        _
      // Predicated region
      $region49: #{nano_gpt_forward.2} parent=15 // pred_check
        %p440 = pneg %p258
      $region50: #{nano_gpt_forward.2} parent=15 // pred_check_branch
        %442 = sbr.rel (%p440) target = $region52
      $region51: #{nano_gpt_forward.2} parent=15 // pred_region
        %p443 = scmp.lt.s32.totalorder %s26, 1
        %s444 = scalar_select %p443, %s26, 1
        %s445 = smul.addr %s444, 4
        %s446 = smul.addr %s445, 4
        %s447 = scalar_lea.vmem %s8, %s446
      $region52: #{nano_gpt_forward.2} parent=15 // pred_fallthru
        _
      // Predicated region
      $region53: #{nano_gpt_forward.2} parent=15 // pred_check
        %p448 = pneg %p284
      $region54: #{nano_gpt_forward.2} parent=15 // pred_check_branch
        %450 = sbr.rel (%p448) target = $region56
      $region55: #{nano_gpt_forward.2} parent=15 // pred_region
        %p451 = scmp.lt.s32.totalorder %s26, 1
        %s452 = scalar_select %p451, %s26, 1
        %s453 = scalar_lea.vmem %s9, %s452
      $region56: #{nano_gpt_forward.2} parent=15 // pred_fallthru
        _
      // Predicated region
      $region57: #{nano_gpt_forward.2} parent=15 // pred_check
        %p454 = pneg %p310
      $region58: #{nano_gpt_forward.2} parent=15 // pred_check_branch
        %456 = sbr.rel (%p454) target = $region60
      $region59: #{nano_gpt_forward.2} parent=15 // pred_region
        %p457 = scmp.lt.s32.totalorder %s26, 1
        %s458 = scalar_select %p457, %s26, 1
        %s459 = smul.addr %s458, 16
        %s460 = smul.addr %s459, 4
        %s461 = scalar_lea.vmem %s10, %s460
      $region60: #{nano_gpt_forward.2} parent=15 // pred_fallthru
        _
      // Predicated region
      $region61: #{nano_gpt_forward.2} parent=15 // pred_check
        %p462 = pneg %p336
      $region62: #{nano_gpt_forward.2} parent=15 // pred_check_branch
        %464 = sbr.rel (%p462) target = $region64
      $region63: #{nano_gpt_forward.2} parent=15 // pred_region
        %p465 = scmp.lt.s32.totalorder %s26, 1
        %s466 = scalar_select %p465, %s26, 1
        %s467 = scalar_lea.vmem %s11, %s466
      $region64: #{nano_gpt_forward.2} parent=15 // pred_fallthru
        _
    $region16: #{nano_gpt_forward.2} parent=5 // pred_fallthru
      _
    %p468 = scmp.le.s32.totalorder 1, %s18
    %p469 = scmp.lt.s32.totalorder %s18, 5
    %p470 = pnand %p468, %p469
    %p471 = pneg %p470
    // Predicated region
    $region65: #{nano_gpt_forward.2} parent=5 // pred_check
      _
    $region66: #{nano_gpt_forward.2} parent=5 // pred_check_branch
      %473 = sbr.rel (%p470) target = $region68
    $region67: #{nano_gpt_forward.2} parent=5 // pred_region
      %s474 = ssub.s32 %s18, 1
      %p475 = scmp.lt.s32.totalorder %s27, 1
      %s476 = scalar_select %p475, %s27, 1
      %s477 = smul.addr %s476, 8
      %s478 = scalar_lea.vmem %s0, %s477
      %p479 = pneg %p56
      %p480 = pneg %p53
      %p481 = scmp.lt.s32.totalorder %s28, 1
      %s482 = scalar_select %p481, %s28, 1
      %s483 = scalar_lea.vmem %s1, %s482
      %p484 = pneg %p82
      %p485 = pneg %p79
      %p486 = scmp.lt.s32.totalorder %s28, 1
      %s487 = scalar_select %p486, %s28, 1
      %s488 = scalar_lea.vmem %s2, %s487
      %p489 = pneg %p108
      %p490 = pneg %p105
      %p491 = scmp.lt.s32.totalorder %s28, 1
      %s492 = scalar_select %p491, %s28, 1
      %s493 = smul.addr %s492, 4
      %s494 = smul.addr %s493, 4
      %s495 = scalar_lea.vmem %s3, %s494
      %p496 = pneg %p134
      %p497 = pneg %p131
      %p498 = scmp.lt.s32.totalorder %s28, 1
      %s499 = scalar_select %p498, %s28, 1
      %s500 = smul.addr %s499, 4
      %s501 = smul.addr %s500, 4
      %s502 = scalar_lea.vmem %s4, %s501
      %p503 = pneg %p160
      %p504 = pneg %p157
      %p505 = scmp.lt.s32.totalorder %s28, 1
      %s506 = scalar_select %p505, %s28, 1
      %s507 = scalar_lea.vmem %s5, %s506
      %p508 = pneg %p186
      %p509 = pneg %p183
      %p510 = scmp.lt.s32.totalorder %s28, 1
      %s511 = scalar_select %p510, %s28, 1
      %s512 = scalar_lea.vmem %s6, %s511
      %p513 = pneg %p212
      %p514 = pneg %p209
      %p515 = scmp.lt.s32.totalorder %s28, 1
      %s516 = scalar_select %p515, %s28, 1
      %s517 = scalar_lea.vmem %s7, %s516
      %p518 = pneg %p238
      %p519 = pneg %p235
      %p520 = scmp.lt.s32.totalorder %s28, 1
      %s521 = scalar_select %p520, %s28, 1
      %s522 = smul.addr %s521, 4
      %s523 = smul.addr %s522, 4
      %s524 = scalar_lea.vmem %s8, %s523
      %p525 = pneg %p264
      %p526 = pneg %p261
      %p527 = scmp.lt.s32.totalorder %s28, 1
      %s528 = scalar_select %p527, %s28, 1
      %s529 = scalar_lea.vmem %s9, %s528
      %p530 = pneg %p290
      %p531 = pneg %p287
      %p532 = scmp.lt.s32.totalorder %s28, 1
      %s533 = scalar_select %p532, %s28, 1
      %s534 = smul.addr %s533, 16
      %s535 = smul.addr %s534, 4
      %s536 = scalar_lea.vmem %s10, %s535
      %p537 = pneg %p316
      %p538 = pneg %p313
      %p539 = scmp.lt.s32.totalorder %s28, 1
      %s540 = scalar_select %p539, %s28, 1
      %s541 = scalar_lea.vmem %s11, %s540
      %p542 = pneg %p342
      %p543 = pneg %p339
      %p544 = pneg %p368
      %p545 = pneg %p365
      %p546 = scmp.lt.s32.totalorder %s27, 1
      %s547 = scalar_select %p546, %s27, 1
      %s548 = smul.addr %s547, 8
      %s549 = scalar_lea.vmem %s12, %s548
      %p550 = scmp.lt.s32.totalorder %s27, 1
      %s551 = scalar_select %p550, %s27, 1
      %s552 = smul.addr %s551, 8
      %s553 = scalar_lea.vmem %s0, %s552
      %p554 = scmp.lt.s32.totalorder %s28, 1
      %s555 = scalar_select %p554, %s28, 1
      %s556 = scalar_lea.vmem %s1, %s555
      %p557 = scmp.lt.s32.totalorder %s28, 1
      %s558 = scalar_select %p557, %s28, 1
      %s559 = scalar_lea.vmem %s2, %s558
      %p560 = scmp.lt.s32.totalorder %s28, 1
      %s561 = scalar_select %p560, %s28, 1
      %s562 = smul.addr %s561, 4
      %s563 = smul.addr %s562, 4
      %s564 = scalar_lea.vmem %s3, %s563
      %p565 = scmp.lt.s32.totalorder %s28, 1
      %s566 = scalar_select %p565, %s28, 1
      %s567 = smul.addr %s566, 4
      %s568 = smul.addr %s567, 4
      %s569 = scalar_lea.vmem %s4, %s568
      %p570 = scmp.lt.s32.totalorder %s28, 1
      %s571 = scalar_select %p570, %s28, 1
      %s572 = scalar_lea.vmem %s5, %s571
      %p573 = scmp.lt.s32.totalorder %s28, 1
      %s574 = scalar_select %p573, %s28, 1
      %s575 = scalar_lea.vmem %s6, %s574
      %p576 = scmp.lt.s32.totalorder %s28, 1
      %s577 = scalar_select %p576, %s28, 1
      %s578 = scalar_lea.vmem %s7, %s577
      %p579 = scmp.lt.s32.totalorder %s28, 1
      %s580 = scalar_select %p579, %s28, 1
      %s581 = smul.addr %s580, 4
      %s582 = smul.addr %s581, 4
      %s583 = scalar_lea.vmem %s8, %s582
      %p584 = scmp.lt.s32.totalorder %s28, 1
      %s585 = scalar_select %p584, %s28, 1
      %s586 = scalar_lea.vmem %s9, %s585
      %p587 = scmp.lt.s32.totalorder %s28, 1
      %s588 = scalar_select %p587, %s28, 1
      %s589 = smul.addr %s588, 16
      %s590 = smul.addr %s589, 4
      %s591 = scalar_lea.vmem %s10, %s590
      %p592 = scmp.lt.s32.totalorder %s28, 1
      %s593 = scalar_select %p592, %s28, 1
      %s594 = scalar_lea.vmem %s11, %s593
      %p595 = scmp.lt.s32.totalorder %s27, 1
      %s596 = scalar_select %p595, %s27, 1
      %s597 = smul.addr %s596, 8
      %s598 = scalar_lea.vmem %s12, %s597
      %p600 = scmp.eq.s32.totalorder %s28, 0
      // Predicated region
      $region69: #{nano_gpt_forward.2} parent=67 // pred_check
        %p601 = pneg %p600
      $region70: #{nano_gpt_forward.2} parent=67 // pred_check_branch
        %603 = sbr.rel (%p601) target = $region72
      $region71: #{nano_gpt_forward.2} parent=67 // pred_region
        %v604 = vld [vmem:[%s553] sm:$0xff]
        %vm605 = vcmask 261120
        %606 = vst.msk [vmem:[%s598] sm:$0xff] %vm605, %v604
      $region72: #{nano_gpt_forward.2} parent=67 // pred_fallthru
        _
      %v607 = vld [vmem:[%s598] sm:$0xff]
      %v608 = vld [vmem:[%s556] sm:$0x1]
      %v609 = vld [vmem:[%s559] sm:$0x1]
      %vm610 = vcmask 261120
      %v611 = vsel %vm610, %v607, 0.0
      %612 = vadd.xlane.f32.xlu0 %v611
      %v613 = vpop.xlane.xlu0 %612
      %v614 = vrcp.pop 32.0
      %v615 = vmul.f32 %v613, %v614
      %v616 = vsub.f32 %v607, %v615
      %v617 = vmul.f32 %v616, %v616
      %v618 = vsel %vm610, %v617, 0.0
      %619 = vadd.xlane.f32.xlu0 %v618
      %v620 = vpop.xlane.xlu0 %619
      %v621 = vmul.f32 %v620, %v614
      %v622 = vadd.f32 %v621, 1e-05
      %v623 = vrsqrt.pop %v622
      %v624 = vmul.f32 %v616, %v623
      %v626 = vlaneseq
      %v627 = vshrl.u32 %v626, 7
      %v628 = vsub.s32 0, %v627
      %v629 = vrot.slane %v608, %v628
      %v631 = vmul.f32 %v624, %v629
      %v633 = vlaneseq
      %v634 = vshrl.u32 %v633, 7
      %v635 = vsub.s32 0, %v634
      %v636 = vrot.slane %v609, %v635
      %v638 = vadd.f32 %v631, %v636
      %v639 = vpack.c.bf16 %v638, %v638
      %v640 = vld [vmem:[%s564] sm:$0xf]
      %v641 = vld [vmem:[%s564 + $0x4] sm:$0xf]
      %v642 = vld [vmem:[%s564 + $0x8] sm:$0xf]
      %v643 = vld [vmem:[%s564 + $0xc] sm:$0xf]
      %v648 = vunpack.c.l.b16 %v640
      %v649 = vunpack.c.l.b16 %v641
      %v650 = vunpack.c.l.b16 %v642
      %v651 = vunpack.c.l.b16 %v643
      %v652 = vpack.c.b16 %v649, %v648
      %v653 = vpack.c.b16 %v651, %v650
      %v657 = vsel %vm610, %v639, 0
      %659 = vmatprep.subr.bf16.mxu0 0
      %660 = vmatpush1.bf16.msra.mxu0 0
      %661 = vmatprep.subr.bf16.mxu0 0
      %662 = vmatpush1.bf16.msra.mxu0 0
      %663 = vmatprep.subr.bf16.mxu0 0
      %664 = vmatpush1.bf16.msra.mxu0 0
      %665 = vmatprep.subr.bf16.mxu0 0
      %666 = vmatpush1.bf16.msra.mxu0 0
      %667 = vmatprep.subr.bf16.mxu0 0
      %668 = vmatpush1.bf16.msra.mxu0 0
      %669 = vmatprep.subr.bf16.mxu0 0
      %670 = vmatpush1.bf16.msra.mxu0 0
      %671 = vmatprep.subr.bf16.mxu0 0
      %672 = vmatpush1.bf16.msra.mxu0 %v653
      %673 = vmatprep.subr.bf16.mxu0 0
      %674 = vmatpush1.bf16.msra.mxu0 %v652
      %675 = vmatprep.subr.bf16.mxu0 0
      %676 = vmatpush2.bf16.msra.mxu0 0
      %677 = vmatprep.subr.bf16.mxu0 0
      %678 = vmatpush2.bf16.msra.mxu0 0
      %679 = vmatprep.subr.bf16.mxu0 0
      %680 = vmatpush2.bf16.msra.mxu0 0
      %681 = vmatprep.subr.bf16.mxu0 0
      %682 = vmatpush2.bf16.msra.mxu0 0
      %683 = vmatprep.subr.bf16.mxu0 0
      %684 = vmatpush2.bf16.msra.mxu0 0
      %685 = vmatprep.subr.bf16.mxu0 0
      %686 = vmatpush2.bf16.msra.mxu0 0
      %687 = vmatprep.subr.bf16.mxu0 0
      %688 = vmatpush2.bf16.msra.mxu0 0
      %689 = vmatprep.subr.bf16.mxu0 0
      %690 = vmatpush2.bf16.msra.mxu0 0
      %691 = vmatprep.mubr.bf16.mxu0 0
      %692 = vmatmul.mubr.bf16.gmra.mxu0 %v657
      %v693 = vpop.f32.mrf.mxu0
      %v694 = vadd.f32 0.0, %v693
      %v695 = vpop.f32.mrf.mxu0
      %v696 = vpop.f32.mrf.mxu0
      %v697 = vpop.f32.mrf.mxu0
      %698 = vdwg.mxu0
      %v699 = vlaneseq
      %v700 = vshrl.u32 %v699, 7
      %v701 = vlaneseq
      %v702 = vand.u32 %v701, 127
      %vm703 = vcmp.ge.s32.totalorder %v700, %v702
      %v704 = vpack.c.bf16 %v694, %v694
      %706 = vrot.lane.b32.xlu0 %v704, 96
      %v707 = vpop.permute.xlu0 %706
      %vm708 = vcmask 64512
      %v710 = vsel %vm708, %v704, 0
      %v713 = vsel %vm708, %v707, 0
      %715 = vmatprep.subr.bf16.mxu0 0
      %716 = vmatpush1.bf16.xpose.msra.mxu0 0
      %717 = vmatprep.subr.bf16.mxu0 0
      %718 = vmatpush1.bf16.xpose.msra.mxu0 0
      %719 = vmatprep.subr.bf16.mxu0 0
      %720 = vmatpush1.bf16.xpose.msra.mxu0 0
      %721 = vmatprep.subr.bf16.mxu0 0
      %722 = vmatpush1.bf16.xpose.msra.mxu0 0
      %723 = vmatprep.subr.bf16.mxu0 0
      %724 = vmatpush1.bf16.xpose.msra.mxu0 0
      %725 = vmatprep.subr.bf16.mxu0 0
      %726 = vmatpush1.bf16.xpose.msra.mxu0 0
      %727 = vmatprep.subr.bf16.mxu0 0
      %728 = vmatpush1.bf16.xpose.msra.mxu0 0
      %729 = vmatprep.subr.bf16.mxu0 0
      %730 = vmatpush1.bf16.xpose.msra.mxu0 %v713
      %731 = vmatprep.subr.bf16.mxu0 0
      %732 = vmatpush2.bf16.xpose.msra.mxu0 0
      %733 = vmatprep.subr.bf16.mxu0 0
      %734 = vmatpush2.bf16.xpose.msra.mxu0 0
      %735 = vmatprep.subr.bf16.mxu0 0
      %736 = vmatpush2.bf16.xpose.msra.mxu0 0
      %737 = vmatprep.subr.bf16.mxu0 0
      %738 = vmatpush2.bf16.xpose.msra.mxu0 0
      %739 = vmatprep.subr.bf16.mxu0 0
      %740 = vmatpush2.bf16.xpose.msra.mxu0 0
      %741 = vmatprep.subr.bf16.mxu0 0
      %742 = vmatpush2.bf16.xpose.msra.mxu0 0
      %743 = vmatprep.subr.bf16.mxu0 0
      %744 = vmatpush2.bf16.xpose.msra.mxu0 0
      %745 = vmatprep.subr.bf16.mxu0 0
      %746 = vmatpush2.bf16.xpose.msra.mxu0 0
      %747 = vmatprep.mubr.bf16.mxu0 0
      %748 = vmatmul.mubr.bf16.gmra.mxu0 %v710
      %v749 = vpop.f32.mrf.mxu0
      %v750 = vadd.f32 0.0, %v749
      %v751 = vpop.f32.mrf.mxu0
      %v752 = vpop.f32.mrf.mxu0
      %v753 = vpop.f32.mrf.mxu0
      %754 = vdwg.mxu0
      %v755 = vmul.f32 %v750, 0.35355338
      %v756 = vsel %vm703, %v755, -1e+30
      %v757 = vsel %vm708, %v756, -inf
      %758 = vmax.xlane.f32.xlu0 %v757
      %v759 = vpop.xlane.xlu0 %758
      %v760 = vsub.f32 %v756, %v759
      %v761 = vmul.f32 %v760, 1.442695
      %v762 = vpow.pop %v761
      %v763 = vsel %vm708, %v762, 0.0
      %764 = vadd.xlane.f32.xlu0 %v763
      %v765 = vpop.xlane.xlu0 %764
      %v766 = vrcp.pop %v765
      %v767 = vmul.f32 %v762, %v766
      %v768 = vpack.c.bf16 %v767, %v767
      %769 = vrot.lane.b32.xlu0 %v704, 64
      %v770 = vpop.permute.xlu0 %769
      %v772 = vsel %vm708, %v768, 0
      %vm774 = vcmask 1043456
      %v776 = vsel %vm774, %v770, 0
      %778 = vmatprep.subr.bf16.mxu0 0
      %779 = vmatpush1.bf16.msra.mxu0 0
      %780 = vmatprep.subr.bf16.mxu0 0
      %781 = vmatpush1.bf16.msra.mxu0 0
      %782 = vmatprep.subr.bf16.mxu0 0
      %783 = vmatpush1.bf16.msra.mxu0 0
      %784 = vmatprep.subr.bf16.mxu0 0
      %785 = vmatpush1.bf16.msra.mxu0 0
      %786 = vmatprep.subr.bf16.mxu0 0
      %787 = vmatpush1.bf16.msra.mxu0 0
      %788 = vmatprep.subr.bf16.mxu0 0
      %789 = vmatpush1.bf16.msra.mxu0 0
      %790 = vmatprep.subr.bf16.mxu0 0
      %791 = vmatpush1.bf16.msra.mxu0 0
      %792 = vmatprep.subr.bf16.mxu0 0
      %793 = vmatpush1.bf16.msra.mxu0 %v776
      %794 = vmatprep.subr.bf16.mxu0 0
      %795 = vmatpush2.bf16.msra.mxu0 0
      %796 = vmatprep.subr.bf16.mxu0 0
      %797 = vmatpush2.bf16.msra.mxu0 0
      %798 = vmatprep.subr.bf16.mxu0 0
      %799 = vmatpush2.bf16.msra.mxu0 0
      %800 = vmatprep.subr.bf16.mxu0 0
      %801 = vmatpush2.bf16.msra.mxu0 0
      %802 = vmatprep.subr.bf16.mxu0 0
      %803 = vmatpush2.bf16.msra.mxu0 0
      %804 = vmatprep.subr.bf16.mxu0 0
      %805 = vmatpush2.bf16.msra.mxu0 0
      %806 = vmatprep.subr.bf16.mxu0 0
      %807 = vmatpush2.bf16.msra.mxu0 0
      %808 = vmatprep.subr.bf16.mxu0 0
      %809 = vmatpush2.bf16.msra.mxu0 0
      %810 = vmatprep.mubr.bf16.mxu0 0
      %811 = vmatmul.mubr.bf16.gmra.mxu0 %v772
      %v812 = vpop.f32.mrf.mxu0
      %v813 = vadd.f32 0.0, %v812
      %v814 = vpop.f32.mrf.mxu0
      %v815 = vpop.f32.mrf.mxu0
      %v816 = vpop.f32.mrf.mxu0
      %817 = vdwg.mxu0
      %818 = vrot.lane.b32.xlu0 %v704, 120
      %v819 = vpop.permute.xlu0 %818
      %820 = vrot.lane.b32.xlu0 %v704, 88
      %v821 = vpop.permute.xlu0 %820
      %v823 = vsel %vm708, %v819, 0
      %v826 = vsel %vm708, %v821, 0
      %828 = vmatprep.subr.bf16.mxu0 0
      %829 = vmatpush1.bf16.xpose.msra.mxu0 0
      %830 = vmatprep.subr.bf16.mxu0 0
      %831 = vmatpush1.bf16.xpose.msra.mxu0 0
      %832 = vmatprep.subr.bf16.mxu0 0
      %833 = vmatpush1.bf16.xpose.msra.mxu0 0
      %834 = vmatprep.subr.bf16.mxu0 0
      %835 = vmatpush1.bf16.xpose.msra.mxu0 0
      %836 = vmatprep.subr.bf16.mxu0 0
      %837 = vmatpush1.bf16.xpose.msra.mxu0 0
      %838 = vmatprep.subr.bf16.mxu0 0
      %839 = vmatpush1.bf16.xpose.msra.mxu0 0
      %840 = vmatprep.subr.bf16.mxu0 0
      %841 = vmatpush1.bf16.xpose.msra.mxu0 0
      %842 = vmatprep.subr.bf16.mxu0 0
      %843 = vmatpush1.bf16.xpose.msra.mxu0 %v826
      %844 = vmatprep.subr.bf16.mxu0 0
      %845 = vmatpush2.bf16.xpose.msra.mxu0 0
      %846 = vmatprep.subr.bf16.mxu0 0
      %847 = vmatpush2.bf16.xpose.msra.mxu0 0
      %848 = vmatprep.subr.bf16.mxu0 0
      %849 = vmatpush2.bf16.xpose.msra.mxu0 0
      %850 = vmatprep.subr.bf16.mxu0 0
      %851 = vmatpush2.bf16.xpose.msra.mxu0 0
      %852 = vmatprep.subr.bf16.mxu0 0
      %853 = vmatpush2.bf16.xpose.msra.mxu0 0
      %854 = vmatprep.subr.bf16.mxu0 0
      %855 = vmatpush2.bf16.xpose.msra.mxu0 0
      %856 = vmatprep.subr.bf16.mxu0 0
      %857 = vmatpush2.bf16.xpose.msra.mxu0 0
      %858 = vmatprep.subr.bf16.mxu0 0
      %859 = vmatpush2.bf16.xpose.msra.mxu0 0
      %860 = vmatprep.mubr.bf16.mxu0 0
      %861 = vmatmul.mubr.bf16.gmra.mxu0 %v823
      %v862 = vpop.f32.mrf.mxu0
      %v863 = vadd.f32 0.0, %v862
      %v864 = vpop.f32.mrf.mxu0
      %v865 = vpop.f32.mrf.mxu0
      %v866 = vpop.f32.mrf.mxu0
      %867 = vdwg.mxu0
      %v868 = vmul.f32 %v863, 0.35355338
      %v869 = vsel %vm703, %v868, -1e+30
      %v870 = vsel %vm708, %v869, -inf
      %871 = vmax.xlane.f32.xlu0 %v870
      %v872 = vpop.xlane.xlu0 %871
      %v873 = vsub.f32 %v869, %v872
      %v874 = vmul.f32 %v873, 1.442695
      %v875 = vpow.pop %v874
      %v876 = vsel %vm708, %v875, 0.0
      %877 = vadd.xlane.f32.xlu0 %v876
      %v878 = vpop.xlane.xlu0 %877
      %v879 = vrcp.pop %v878
      %v880 = vmul.f32 %v875, %v879
      %v881 = vpack.c.bf16 %v880, %v880
      %882 = vrot.lane.b32.xlu0 %v704, 56
      %v883 = vpop.permute.xlu0 %882
      %v885 = vsel %vm708, %v881, 0
      %v888 = vsel %vm774, %v883, 0
      %890 = vmatprep.subr.bf16.mxu0 0
      %891 = vmatpush1.bf16.msra.mxu0 0
      %892 = vmatprep.subr.bf16.mxu0 0
      %893 = vmatpush1.bf16.msra.mxu0 0
      %894 = vmatprep.subr.bf16.mxu0 0
      %895 = vmatpush1.bf16.msra.mxu0 0
      %896 = vmatprep.subr.bf16.mxu0 0
      %897 = vmatpush1.bf16.msra.mxu0 0
      %898 = vmatprep.subr.bf16.mxu0 0
      %899 = vmatpush1.bf16.msra.mxu0 0
      %900 = vmatprep.subr.bf16.mxu0 0
      %901 = vmatpush1.bf16.msra.mxu0 0
      %902 = vmatprep.subr.bf16.mxu0 0
      %903 = vmatpush1.bf16.msra.mxu0 0
      %904 = vmatprep.subr.bf16.mxu0 0
      %905 = vmatpush1.bf16.msra.mxu0 %v888
      %906 = vmatprep.subr.bf16.mxu0 0
      %907 = vmatpush2.bf16.msra.mxu0 0
      %908 = vmatprep.subr.bf16.mxu0 0
      %909 = vmatpush2.bf16.msra.mxu0 0
      %910 = vmatprep.subr.bf16.mxu0 0
      %911 = vmatpush2.bf16.msra.mxu0 0
      %912 = vmatprep.subr.bf16.mxu0 0
      %913 = vmatpush2.bf16.msra.mxu0 0
      %914 = vmatprep.subr.bf16.mxu0 0
      %915 = vmatpush2.bf16.msra.mxu0 0
      %916 = vmatprep.subr.bf16.mxu0 0
      %917 = vmatpush2.bf16.msra.mxu0 0
      %918 = vmatprep.subr.bf16.mxu0 0
      %919 = vmatpush2.bf16.msra.mxu0 0
      %920 = vmatprep.subr.bf16.mxu0 0
      %921 = vmatpush2.bf16.msra.mxu0 0
      %922 = vmatprep.mubr.bf16.mxu0 0
      %923 = vmatmul.mubr.bf16.gmra.mxu0 %v885
      %v924 = vpop.f32.mrf.mxu0
      %v925 = vadd.f32 0.0, %v924
      %v926 = vpop.f32.mrf.mxu0
      %v927 = vpop.f32.mrf.mxu0
      %v928 = vpop.f32.mrf.mxu0
      %929 = vdwg.mxu0
      %930 = vrot.lane.b32.xlu0 %v704, 112
      %v931 = vpop.permute.xlu0 %930
      %932 = vrot.lane.b32.xlu0 %v704, 80
      %v933 = vpop.permute.xlu0 %932
      %v935 = vsel %vm708, %v931, 0
      %v938 = vsel %vm708, %v933, 0
      %940 = vmatprep.subr.bf16.mxu0 0
      %941 = vmatpush1.bf16.xpose.msra.mxu0 0
      %942 = vmatprep.subr.bf16.mxu0 0
      %943 = vmatpush1.bf16.xpose.msra.mxu0 0
      %944 = vmatprep.subr.bf16.mxu0 0
      %945 = vmatpush1.bf16.xpose.msra.mxu0 0
      %946 = vmatprep.subr.bf16.mxu0 0
      %947 = vmatpush1.bf16.xpose.msra.mxu0 0
      %948 = vmatprep.subr.bf16.mxu0 0
      %949 = vmatpush1.bf16.xpose.msra.mxu0 0
      %950 = vmatprep.subr.bf16.mxu0 0
      %951 = vmatpush1.bf16.xpose.msra.mxu0 0
      %952 = vmatprep.subr.bf16.mxu0 0
      %953 = vmatpush1.bf16.xpose.msra.mxu0 0
      %954 = vmatprep.subr.bf16.mxu0 0
      %955 = vmatpush1.bf16.xpose.msra.mxu0 %v938
      %956 = vmatprep.subr.bf16.mxu0 0
      %957 = vmatpush2.bf16.xpose.msra.mxu0 0
      %958 = vmatprep.subr.bf16.mxu0 0
      %959 = vmatpush2.bf16.xpose.msra.mxu0 0
      %960 = vmatprep.subr.bf16.mxu0 0
      %961 = vmatpush2.bf16.xpose.msra.mxu0 0
      %962 = vmatprep.subr.bf16.mxu0 0
      %963 = vmatpush2.bf16.xpose.msra.mxu0 0
      %964 = vmatprep.subr.bf16.mxu0 0
      %965 = vmatpush2.bf16.xpose.msra.mxu0 0
      %966 = vmatprep.subr.bf16.mxu0 0
      %967 = vmatpush2.bf16.xpose.msra.mxu0 0
      %968 = vmatprep.subr.bf16.mxu0 0
      %969 = vmatpush2.bf16.xpose.msra.mxu0 0
      %970 = vmatprep.subr.bf16.mxu0 0
      %971 = vmatpush2.bf16.xpose.msra.mxu0 0
      %972 = vmatprep.mubr.bf16.mxu0 0
      %973 = vmatmul.mubr.bf16.gmra.mxu0 %v935
      %v974 = vpop.f32.mrf.mxu0
      %v975 = vadd.f32 0.0, %v974
      %v976 = vpop.f32.mrf.mxu0
      %v977 = vpop.f32.mrf.mxu0
      %v978 = vpop.f32.mrf.mxu0
      %979 = vdwg.mxu0
      %v980 = vmul.f32 %v975, 0.35355338
      %v981 = vsel %vm703, %v980, -1e+30
      %v982 = vsel %vm708, %v981, -inf
      %983 = vmax.xlane.f32.xlu0 %v982
      %v984 = vpop.xlane.xlu0 %983
      %v985 = vsub.f32 %v981, %v984
      %v986 = vmul.f32 %v985, 1.442695
      %v987 = vpow.pop %v986
      %v988 = vsel %vm708, %v987, 0.0
      %989 = vadd.xlane.f32.xlu0 %v988
      %v990 = vpop.xlane.xlu0 %989
      %v991 = vrcp.pop %v990
      %v992 = vmul.f32 %v987, %v991
      %v993 = vpack.c.bf16 %v992, %v992
      %994 = vrot.lane.b32.xlu0 %v704, 48
      %v995 = vpop.permute.xlu0 %994
      %v997 = vsel %vm708, %v993, 0
      %v1000 = vsel %vm774, %v995, 0
      %1002 = vmatprep.subr.bf16.mxu0 0
      %1003 = vmatpush1.bf16.msra.mxu0 0
      %1004 = vmatprep.subr.bf16.mxu0 0
      %1005 = vmatpush1.bf16.msra.mxu0 0
      %1006 = vmatprep.subr.bf16.mxu0 0
      %1007 = vmatpush1.bf16.msra.mxu0 0
      %1008 = vmatprep.subr.bf16.mxu0 0
      %1009 = vmatpush1.bf16.msra.mxu0 0
      %1010 = vmatprep.subr.bf16.mxu0 0
      %1011 = vmatpush1.bf16.msra.mxu0 0
      %1012 = vmatprep.subr.bf16.mxu0 0
      %1013 = vmatpush1.bf16.msra.mxu0 0
      %1014 = vmatprep.subr.bf16.mxu0 0
      %1015 = vmatpush1.bf16.msra.mxu0 0
      %1016 = vmatprep.subr.bf16.mxu0 0
      %1017 = vmatpush1.bf16.msra.mxu0 %v1000
      %1018 = vmatprep.subr.bf16.mxu0 0
      %1019 = vmatpush2.bf16.msra.mxu0 0
      %1020 = vmatprep.subr.bf16.mxu0 0
      %1021 = vmatpush2.bf16.msra.mxu0 0
      %1022 = vmatprep.subr.bf16.mxu0 0
      %1023 = vmatpush2.bf16.msra.mxu0 0
      %1024 = vmatprep.subr.bf16.mxu0 0
      %1025 = vmatpush2.bf16.msra.mxu0 0
      %1026 = vmatprep.subr.bf16.mxu0 0
      %1027 = vmatpush2.bf16.msra.mxu0 0
      %1028 = vmatprep.subr.bf16.mxu0 0
      %1029 = vmatpush2.bf16.msra.mxu0 0
      %1030 = vmatprep.subr.bf16.mxu0 0
      %1031 = vmatpush2.bf16.msra.mxu0 0
      %1032 = vmatprep.subr.bf16.mxu0 0
      %1033 = vmatpush2.bf16.msra.mxu0 0
      %1034 = vmatprep.mubr.bf16.mxu0 0
      %1035 = vmatmul.mubr.bf16.gmra.mxu0 %v997
      %v1036 = vpop.f32.mrf.mxu0
      %v1037 = vadd.f32 0.0, %v1036
      %v1038 = vpop.f32.mrf.mxu0
      %v1039 = vpop.f32.mrf.mxu0
      %v1040 = vpop.f32.mrf.mxu0
      %1041 = vdwg.mxu0
      %1042 = vrot.lane.b32.xlu0 %v704, 104
      %v1043 = vpop.permute.xlu0 %1042
      %1044 = vrot.lane.b32.xlu0 %v704, 72
      %v1045 = vpop.permute.xlu0 %1044
      %v1047 = vsel %vm708, %v1043, 0
      %v1050 = vsel %vm708, %v1045, 0
      %1052 = vmatprep.subr.bf16.mxu0 0
      %1053 = vmatpush1.bf16.xpose.msra.mxu0 0
      %1054 = vmatprep.subr.bf16.mxu0 0
      %1055 = vmatpush1.bf16.xpose.msra.mxu0 0
      %1056 = vmatprep.subr.bf16.mxu0 0
      %1057 = vmatpush1.bf16.xpose.msra.mxu0 0
      %1058 = vmatprep.subr.bf16.mxu0 0
      %1059 = vmatpush1.bf16.xpose.msra.mxu0 0
      %1060 = vmatprep.subr.bf16.mxu0 0
      %1061 = vmatpush1.bf16.xpose.msra.mxu0 0
      %1062 = vmatprep.subr.bf16.mxu0 0
      %1063 = vmatpush1.bf16.xpose.msra.mxu0 0
      %1064 = vmatprep.subr.bf16.mxu0 0
      %1065 = vmatpush1.bf16.xpose.msra.mxu0 0
      %1066 = vmatprep.subr.bf16.mxu0 0
      %1067 = vmatpush1.bf16.xpose.msra.mxu0 %v1050
      %1068 = vmatprep.subr.bf16.mxu0 0
      %1069 = vmatpush2.bf16.xpose.msra.mxu0 0
      %1070 = vmatprep.subr.bf16.mxu0 0
      %1071 = vmatpush2.bf16.xpose.msra.mxu0 0
      %1072 = vmatprep.subr.bf16.mxu0 0
      %1073 = vmatpush2.bf16.xpose.msra.mxu0 0
      %1074 = vmatprep.subr.bf16.mxu0 0
      %1075 = vmatpush2.bf16.xpose.msra.mxu0 0
      %1076 = vmatprep.subr.bf16.mxu0 0
      %1077 = vmatpush2.bf16.xpose.msra.mxu0 0
      %1078 = vmatprep.subr.bf16.mxu0 0
      %1079 = vmatpush2.bf16.xpose.msra.mxu0 0
      %1080 = vmatprep.subr.bf16.mxu0 0
      %1081 = vmatpush2.bf16.xpose.msra.mxu0 0
      %1082 = vmatprep.subr.bf16.mxu0 0
      %1083 = vmatpush2.bf16.xpose.msra.mxu0 0
      %1084 = vmatprep.mubr.bf16.mxu0 0
      %1085 = vmatmul.mubr.bf16.gmra.mxu0 %v1047
      %v1086 = vpop.f32.mrf.mxu0
      %v1087 = vadd.f32 0.0, %v1086
      %v1088 = vpop.f32.mrf.mxu0
      %v1089 = vpop.f32.mrf.mxu0
      %v1090 = vpop.f32.mrf.mxu0
      %1091 = vdwg.mxu0
      %v1092 = vmul.f32 %v1087, 0.35355338
      %v1093 = vsel %vm703, %v1092, -1e+30
      %v1094 = vsel %vm708, %v1093, -inf
      %1095 = vmax.xlane.f32.xlu0 %v1094
      %v1096 = vpop.xlane.xlu0 %1095
      %v1097 = vsub.f32 %v1093, %v1096
      %v1098 = vmul.f32 %v1097, 1.442695
      %v1099 = vpow.pop %v1098
      %v1100 = vsel %vm708, %v1099, 0.0
      %1101 = vadd.xlane.f32.xlu0 %v1100
      %v1102 = vpop.xlane.xlu0 %1101
      %v1103 = vrcp.pop %v1102
      %v1104 = vmul.f32 %v1099, %v1103
      %v1105 = vpack.c.bf16 %v1104, %v1104
      %1106 = vrot.lane.b32.xlu0 %v704, 40
      %v1107 = vpop.permute.xlu0 %1106
      %v1109 = vsel %vm708, %v1105, 0
      %v1112 = vsel %vm774, %v1107, 0
      %1114 = vmatprep.subr.bf16.mxu0 0
      %1115 = vmatpush1.bf16.msra.mxu0 0
      %1116 = vmatprep.subr.bf16.mxu0 0
      %1117 = vmatpush1.bf16.msra.mxu0 0
      %1118 = vmatprep.subr.bf16.mxu0 0
      %1119 = vmatpush1.bf16.msra.mxu0 0
      %1120 = vmatprep.subr.bf16.mxu0 0
      %1121 = vmatpush1.bf16.msra.mxu0 0
      %1122 = vmatprep.subr.bf16.mxu0 0
      %1123 = vmatpush1.bf16.msra.mxu0 0
      %1124 = vmatprep.subr.bf16.mxu0 0
      %1125 = vmatpush1.bf16.msra.mxu0 0
      %1126 = vmatprep.subr.bf16.mxu0 0
      %1127 = vmatpush1.bf16.msra.mxu0 0
      %1128 = vmatprep.subr.bf16.mxu0 0
      %1129 = vmatpush1.bf16.msra.mxu0 %v1112
      %1130 = vmatprep.subr.bf16.mxu0 0
      %1131 = vmatpush2.bf16.msra.mxu0 0
      %1132 = vmatprep.subr.bf16.mxu0 0
      %1133 = vmatpush2.bf16.msra.mxu0 0
      %1134 = vmatprep.subr.bf16.mxu0 0
      %1135 = vmatpush2.bf16.msra.mxu0 0
      %1136 = vmatprep.subr.bf16.mxu0 0
      %1137 = vmatpush2.bf16.msra.mxu0 0
      %1138 = vmatprep.subr.bf16.mxu0 0
      %1139 = vmatpush2.bf16.msra.mxu0 0
      %1140 = vmatprep.subr.bf16.mxu0 0
      %1141 = vmatpush2.bf16.msra.mxu0 0
      %1142 = vmatprep.subr.bf16.mxu0 0
      %1143 = vmatpush2.bf16.msra.mxu0 0
      %1144 = vmatprep.subr.bf16.mxu0 0
      %1145 = vmatpush2.bf16.msra.mxu0 0
      %1146 = vmatprep.mubr.bf16.mxu0 0
      %1147 = vmatmul.mubr.bf16.gmra.mxu0 %v1109
      %v1148 = vpop.f32.mrf.mxu0
      %v1149 = vadd.f32 0.0, %v1148
      %v1150 = vpop.f32.mrf.mxu0
      %v1151 = vpop.f32.mrf.mxu0
      %v1152 = vpop.f32.mrf.mxu0
      %1153 = vdwg.mxu0
      %1155 = vrot.lane.b32.xlu0 %v925, 8
      %v1156 = vpop.permute.xlu0 %1155
      %1159 = vrot.lane.b32.xlu0 %v1037, 16
      %v1160 = vpop.permute.xlu0 %1159
      %1163 = vrot.lane.b32.xlu0 %v1149, 24
      %v1164 = vpop.permute.xlu0 %1163
      %v1166 = vsel %vm708, %v813, %v1156
      %vm1167 = vcmask 130048
      %v1168 = vsel %vm1167, %v1166, %v1160
      %vm1169 = vcmask 195584
      %v1170 = vsel %vm1169, %v1168, %v1164
      %v1171 = vpack.c.bf16 %v1170, %v1170
      %v1172 = vld [vmem:[%s569] sm:$0xf]
      %v1173 = vld [vmem:[%s569 + $0x4] sm:$0xf]
      %v1174 = vld [vmem:[%s569 + $0x8] sm:$0xf]
      %v1175 = vld [vmem:[%s569 + $0xc] sm:$0xf]
      %v1176 = vld [vmem:[%s572] sm:$0x1]
      %v1178 = vlaneseq
      %v1179 = vshrl.u32 %v1178, 7
      %v1180 = vsub.s32 0, %v1179
      %v1181 = vrot.slane %v1176, %v1180
      %v1187 = vunpack.c.l.b16 %v1172
      %v1188 = vunpack.c.l.b16 %v1173
      %v1189 = vunpack.c.l.b16 %v1174
      %v1190 = vunpack.c.l.b16 %v1175
      %v1191 = vpack.c.b16 %v1188, %v1187
      %v1192 = vpack.c.b16 %v1190, %v1189
      %v1196 = vsel %vm610, %v1171, 0
      %1198 = vmatprep.subr.bf16.mxu0 0
      %1199 = vmatpush1.bf16.msra.mxu0 0
      %1200 = vmatprep.subr.bf16.mxu0 0
      %1201 = vmatpush1.bf16.msra.mxu0 0
      %1202 = vmatprep.subr.bf16.mxu0 0
      %1203 = vmatpush1.bf16.msra.mxu0 0
      %1204 = vmatprep.subr.bf16.mxu0 0
      %1205 = vmatpush1.bf16.msra.mxu0 0
      %1206 = vmatprep.subr.bf16.mxu0 0
      %1207 = vmatpush1.bf16.msra.mxu0 0
      %1208 = vmatprep.subr.bf16.mxu0 0
      %1209 = vmatpush1.bf16.msra.mxu0 0
      %1210 = vmatprep.subr.bf16.mxu0 0
      %1211 = vmatpush1.bf16.msra.mxu0 %v1192
      %1212 = vmatprep.subr.bf16.mxu0 0
      %1213 = vmatpush1.bf16.msra.mxu0 %v1191
      %1214 = vmatprep.subr.bf16.mxu0 0
      %1215 = vmatpush2.bf16.msra.mxu0 0
      %1216 = vmatprep.subr.bf16.mxu0 0
      %1217 = vmatpush2.bf16.msra.mxu0 0
      %1218 = vmatprep.subr.bf16.mxu0 0
      %1219 = vmatpush2.bf16.msra.mxu0 0
      %1220 = vmatprep.subr.bf16.mxu0 0
      %1221 = vmatpush2.bf16.msra.mxu0 0
      %1222 = vmatprep.subr.bf16.mxu0 0
      %1223 = vmatpush2.bf16.msra.mxu0 0
      %1224 = vmatprep.subr.bf16.mxu0 0
      %1225 = vmatpush2.bf16.msra.mxu0 0
      %1226 = vmatprep.subr.bf16.mxu0 0
      %1227 = vmatpush2.bf16.msra.mxu0 0
      %1228 = vmatprep.subr.bf16.mxu0 0
      %1229 = vmatpush2.bf16.msra.mxu0 0
      %1230 = vmatprep.mubr.bf16.mxu0 0
      %1231 = vmatmul.mubr.bf16.gmra.mxu0 %v1196
      %v1232 = vpop.f32.mrf.mxu0
      %v1233 = vadd.f32 %v1181, %v1232
      %v1234 = vpop.f32.mrf.mxu0
      %v1235 = vpop.f32.mrf.mxu0
      %v1236 = vpop.f32.mrf.mxu0
      %1237 = vdwg.mxu0
      %v1238 = vadd.f32 %v607, %v1233
      %v1239 = vld [vmem:[%s575] sm:$0x1]
      %v1240 = vld [vmem:[%s578] sm:$0x1]
      %v1241 = vsel %vm610, %v1238, 0.0
      %1242 = vadd.xlane.f32.xlu0 %v1241
      %v1243 = vpop.xlane.xlu0 %1242
      %v1244 = vmul.f32 %v1243, %v614
      %v1245 = vsub.f32 %v1238, %v1244
      %v1246 = vmul.f32 %v1245, %v1245
      %v1247 = vsel %vm610, %v1246, 0.0
      %1248 = vadd.xlane.f32.xlu0 %v1247
      %v1249 = vpop.xlane.xlu0 %1248
      %v1250 = vmul.f32 %v1249, %v614
      %v1251 = vadd.f32 %v1250, 1e-05
      %v1252 = vrsqrt.pop %v1251
      %v1253 = vmul.f32 %v1245, %v1252
      %v1255 = vlaneseq
      %v1256 = vshrl.u32 %v1255, 7
      %v1257 = vsub.s32 0, %v1256
      %v1258 = vrot.slane %v1239, %v1257
      %v1260 = vmul.f32 %v1253, %v1258
      %v1262 = vlaneseq
      %v1263 = vshrl.u32 %v1262, 7
      %v1264 = vsub.s32 0, %v1263
      %v1265 = vrot.slane %v1240, %v1264
      %v1267 = vadd.f32 %v1260, %v1265
      %v1268 = vpack.c.bf16 %v1267, %v1267
      %v1269 = vld [vmem:[%s583] sm:$0xf]
      %v1270 = vld [vmem:[%s583 + $0x4] sm:$0xf]
      %v1271 = vld [vmem:[%s583 + $0x8] sm:$0xf]
      %v1272 = vld [vmem:[%s583 + $0xc] sm:$0xf]
      %v1273 = vld [vmem:[%s586] sm:$0x1]
      %v1275 = vlaneseq
      %v1276 = vshrl.u32 %v1275, 7
      %v1277 = vsub.s32 0, %v1276
      %v1278 = vrot.slane %v1273, %v1277
      %v1284 = vunpack.c.l.b16 %v1269
      %v1285 = vunpack.c.l.b16 %v1270
      %v1286 = vunpack.c.l.b16 %v1271
      %v1287 = vunpack.c.l.b16 %v1272
      %v1288 = vpack.c.b16 %v1285, %v1284
      %v1289 = vpack.c.b16 %v1287, %v1286
      %v1293 = vsel %vm610, %v1268, 0
      %1295 = vmatprep.subr.bf16.mxu0 0
      %1296 = vmatpush1.bf16.msra.mxu0 0
      %1297 = vmatprep.subr.bf16.mxu0 0
      %1298 = vmatpush1.bf16.msra.mxu0 0
      %1299 = vmatprep.subr.bf16.mxu0 0
      %1300 = vmatpush1.bf16.msra.mxu0 0
      %1301 = vmatprep.subr.bf16.mxu0 0
      %1302 = vmatpush1.bf16.msra.mxu0 0
      %1303 = vmatprep.subr.bf16.mxu0 0
      %1304 = vmatpush1.bf16.msra.mxu0 0
      %1305 = vmatprep.subr.bf16.mxu0 0
      %1306 = vmatpush1.bf16.msra.mxu0 0
      %1307 = vmatprep.subr.bf16.mxu0 0
      %1308 = vmatpush1.bf16.msra.mxu0 %v1289
      %1309 = vmatprep.subr.bf16.mxu0 0
      %1310 = vmatpush1.bf16.msra.mxu0 %v1288
      %1311 = vmatprep.subr.bf16.mxu0 0
      %1312 = vmatpush2.bf16.msra.mxu0 0
      %1313 = vmatprep.subr.bf16.mxu0 0
      %1314 = vmatpush2.bf16.msra.mxu0 0
      %1315 = vmatprep.subr.bf16.mxu0 0
      %1316 = vmatpush2.bf16.msra.mxu0 0
      %1317 = vmatprep.subr.bf16.mxu0 0
      %1318 = vmatpush2.bf16.msra.mxu0 0
      %1319 = vmatprep.subr.bf16.mxu0 0
      %1320 = vmatpush2.bf16.msra.mxu0 0
      %1321 = vmatprep.subr.bf16.mxu0 0
      %1322 = vmatpush2.bf16.msra.mxu0 0
      %1323 = vmatprep.subr.bf16.mxu0 0
      %1324 = vmatpush2.bf16.msra.mxu0 0
      %1325 = vmatprep.subr.bf16.mxu0 0
      %1326 = vmatpush2.bf16.msra.mxu0 0
      %1327 = vmatprep.mubr.bf16.mxu0 0
      %1328 = vmatmul.mubr.bf16.gmra.mxu0 %v1293
      %v1329 = vpop.f32.mrf.mxu0
      %v1330 = vadd.f32 %v1278, %v1329
      %v1331 = vpop.f32.mrf.mxu0
      %v1332 = vpop.f32.mrf.mxu0
      %v1333 = vpop.f32.mrf.mxu0
      %1334 = vdwg.mxu0
      %v1335 = vmax.f32 %v1330, 0.0
      %v1336 = vpack.c.bf16 %v1335, %v1335
      %v1337 = vld [vmem:[%s591] sm:$0xf]
      %v1338 = vld [vmem:[%s591 + $0x4] sm:$0xf]
      %v1339 = vld [vmem:[%s591 + $0x8] sm:$0xf]
      %v1340 = vld [vmem:[%s591 + $0xc] sm:$0xf]
      %v1341 = vld [vmem:[%s591 + $0x10] sm:$0xf]
      %v1342 = vld [vmem:[%s591 + $0x14] sm:$0xf]
      %v1343 = vld [vmem:[%s591 + $0x18] sm:$0xf]
      %v1344 = vld [vmem:[%s591 + $0x1c] sm:$0xf]
      %v1345 = vld [vmem:[%s591 + $0x20] sm:$0xf]
      %v1346 = vld [vmem:[%s591 + $0x24] sm:$0xf]
      %v1347 = vld [vmem:[%s591 + $0x28] sm:$0xf]
      %v1348 = vld [vmem:[%s591 + $0x2c] sm:$0xf]
      %v1349 = vld [vmem:[%s591 + $0x30] sm:$0xf]
      %v1350 = vld [vmem:[%s591 + $0x34] sm:$0xf]
      %v1351 = vld [vmem:[%s591 + $0x38] sm:$0xf]
      %v1352 = vld [vmem:[%s591 + $0x3c] sm:$0xf]
      %v1353 = vld [vmem:[%s594] sm:$0x1]
      %v1355 = vlaneseq
      %v1356 = vshrl.u32 %v1355, 7
      %v1357 = vsub.s32 0, %v1356
      %v1358 = vrot.slane %v1353, %v1357
      %v1376 = vunpack.c.l.b16 %v1337
      %v1377 = vunpack.c.l.b16 %v1338
      %v1378 = vunpack.c.l.b16 %v1339
      %v1379 = vunpack.c.l.b16 %v1340
      %v1380 = vunpack.c.l.b16 %v1341
      %v1381 = vunpack.c.l.b16 %v1342
      %v1382 = vunpack.c.l.b16 %v1343
      %v1383 = vunpack.c.l.b16 %v1344
      %v1384 = vunpack.c.l.b16 %v1345
      %v1385 = vunpack.c.l.b16 %v1346
      %v1386 = vunpack.c.l.b16 %v1347
      %v1387 = vunpack.c.l.b16 %v1348
      %v1388 = vunpack.c.l.b16 %v1349
      %v1389 = vunpack.c.l.b16 %v1350
      %v1390 = vunpack.c.l.b16 %v1351
      %v1391 = vunpack.c.l.b16 %v1352
      %v1392 = vpack.c.b16 %v1377, %v1376
      %v1393 = vpack.c.b16 %v1379, %v1378
      %v1394 = vpack.c.b16 %v1381, %v1380
      %v1395 = vpack.c.b16 %v1383, %v1382
      %v1396 = vpack.c.b16 %v1385, %v1384
      %v1397 = vpack.c.b16 %v1387, %v1386
      %v1398 = vpack.c.b16 %v1389, %v1388
      %v1399 = vpack.c.b16 %v1391, %v1390
      %1408 = vmatprep.subr.bf16.mxu0 0
      %1409 = vmatpush1.bf16.msra.mxu0 %v1399
      %1410 = vmatprep.subr.bf16.mxu0 0
      %1411 = vmatpush1.bf16.msra.mxu0 %v1398
      %1412 = vmatprep.subr.bf16.mxu0 0
      %1413 = vmatpush1.bf16.msra.mxu0 %v1397
      %1414 = vmatprep.subr.bf16.mxu0 0
      %1415 = vmatpush1.bf16.msra.mxu0 %v1396
      %1416 = vmatprep.subr.bf16.mxu0 0
      %1417 = vmatpush1.bf16.msra.mxu0 %v1395
      %1418 = vmatprep.subr.bf16.mxu0 0
      %1419 = vmatpush1.bf16.msra.mxu0 %v1394
      %1420 = vmatprep.subr.bf16.mxu0 0
      %1421 = vmatpush1.bf16.msra.mxu0 %v1393
      %1422 = vmatprep.subr.bf16.mxu0 0
      %1423 = vmatpush1.bf16.msra.mxu0 %v1392
      %1424 = vmatprep.subr.bf16.mxu0 0
      %1425 = vmatpush2.bf16.msra.mxu0 0
      %1426 = vmatprep.subr.bf16.mxu0 0
      %1427 = vmatpush2.bf16.msra.mxu0 0
      %1428 = vmatprep.subr.bf16.mxu0 0
      %1429 = vmatpush2.bf16.msra.mxu0 0
      %1430 = vmatprep.subr.bf16.mxu0 0
      %1431 = vmatpush2.bf16.msra.mxu0 0
      %1432 = vmatprep.subr.bf16.mxu0 0
      %1433 = vmatpush2.bf16.msra.mxu0 0
      %1434 = vmatprep.subr.bf16.mxu0 0
      %1435 = vmatpush2.bf16.msra.mxu0 0
      %1436 = vmatprep.subr.bf16.mxu0 0
      %1437 = vmatpush2.bf16.msra.mxu0 0
      %1438 = vmatprep.subr.bf16.mxu0 0
      %1439 = vmatpush2.bf16.msra.mxu0 0
      %1440 = vmatprep.mubr.bf16.mxu0 0
      %1441 = vmatmul.mubr.bf16.gmra.mxu0 %v1336
      %v1442 = vpop.f32.mrf.mxu0
      %v1443 = vadd.f32 %v1358, %v1442
      %v1444 = vpop.f32.mrf.mxu0
      %v1445 = vpop.f32.mrf.mxu0
      %v1446 = vpop.f32.mrf.mxu0
      %1447 = vdwg.mxu0
      %v1448 = vadd.f32 %v1238, %v1443
      %1449 = vst.msk [vmem:[%s598] sm:$0xff] %vm610, %v1448
      %p1450 = scmp.lt.s32.totalorder %s27, 1
      %s1451 = scalar_select %p1450, %s27, 1
      %s1452 = smul.addr %s1451, 8
      %s1453 = scalar_lea.vmem %s12, %s1452
      // Predicated region
      $region73: #{nano_gpt_forward.2} parent=67 // pred_check
        %p1454 = pneg %p365
      $region74: #{nano_gpt_forward.2} parent=67 // pred_check_branch
        %1456 = sbr.rel (%p1454) target = $region76
      $region75: #{nano_gpt_forward.2} parent=67 // pred_region
        _
      $region76: #{nano_gpt_forward.2} parent=67 // pred_fallthru
        _
    $region68: #{nano_gpt_forward.2} parent=5 // pred_fallthru
      _
    %p1457 = scmp.le.s32.totalorder 2, %s18
    // Predicated region
    $region77: #{nano_gpt_forward.2} parent=5 // pred_check
      %p1458 = pneg %p1457
    $region78: #{nano_gpt_forward.2} parent=5 // pred_check_branch
      %1460 = sbr.rel (%p1458) target = $region80
    $region79: #{nano_gpt_forward.2} parent=5 // pred_region
      %s1461 = ssub.s32 %s18, 2
      // Predicated region
      $region81: #{nano_gpt_forward.2} parent=79 // pred_check
        %p1462 = pneg %p371
      $region82: #{nano_gpt_forward.2} parent=79 // pred_check_branch
        %1464 = sbr.rel (%p1462) target = $region84
      $region83: #{nano_gpt_forward.2} parent=79 // pred_region
        %p1465 = scmp.lt.s32.totalorder %s29, 1
        %s1466 = scalar_select %p1465, %s29, 1
        %s1467 = smul.addr %s1466, 8
        %s1468 = scalar_lea.vmem %s12, %s1467
      $region84: #{nano_gpt_forward.2} parent=79 // pred_fallthru
        _
    $region80: #{nano_gpt_forward.2} parent=5 // pred_fallthru
      _
  $region6: #{nano_gpt_forward.2} parent=0 // loop_footer
    %s22 = sadd.s32 1, %s18
  $region7: #{nano_gpt_forward.2} parent=0 // loop_footer_branch
    %17 = sbr.rel target = $region3
  $region8: #{nano_gpt_forward.2} parent=0 // loop_exit
    _

</llo_original>
